<compile_context>
chip_gen: v7x
topology: tpu7x:2x2x1
jax: 0.10.0
libtpu: 0.0.40
codegen_flags: <defaults>
</compile_context>

<pallas_src>
import functools

import jax
import jax.numpy as jnp
from jax.experimental import pallas as pl
from jax.experimental.pallas import tpu as pltpu

_BN_EPS = 1e-5


# --------------------------------------------------------------------------------------
# Kernel
# --------------------------------------------------------------------------------------
def _bn_relu_slab(y, gamma_t, beta_t, *, eps, count, cout, wgroups):
    """Training-mode BatchNorm + ReLU on a lane-dense slab y: (N*H, W*C), all f32.

    Per-channel statistics via an XLU lane-rotation butterfly: after log2(W) circular
    rolls by C*2^j lanes, every lane holds the total of its own channel over all W
    width-groups.  gamma_t / beta_t arrive pre-tiled to (1, W*C).  No MXU dots.
    """
    s = jnp.concatenate([jnp.sum(y, axis=0, keepdims=True),
                         jnp.sum(y * y, axis=0, keepdims=True)], axis=0)    # (2, W*C)
    shift = cout
    while shift < cout * wgroups:                 # static Python loop, log2(W) rolls
        s = s + pltpu.roll(s, shift=shift, axis=1)
        shift *= 2
    inv_n = 1.0 / count
    mean = s[0:1] * inv_n                                                   # (1, W*C)
    var = jnp.maximum(s[1:2] * inv_n - mean * mean, 0.0)                    # biased, clamped
    scale = gamma_t * jax.lax.rsqrt(var + eps)
    shift_v = beta_t - mean * scale
    return jnp.maximum(y * scale + shift_v, 0.0)


def _decoder_kernel(x2_ref, xc3_ref, lh_ref, rw_ref, bt_ref, g1_ref, g2_ref,
                    bn1g_ref, bn1b_ref, bn2g_ref, bn2b_ref, o_ref,
                    *, eps, count, hc, cout, wc):
    f32, bf16 = jnp.float32, jnp.bfloat16
    nh = o_ref.shape[0]                            # N*Hc rows

    # Per-image valid-row masks for the +-1 row shifts of the 3x3 convs.
    h_idx = jax.lax.broadcasted_iota(jnp.int32, (nh, 1), 0) % hc
    mask_m1 = (h_idx >= 1).astype(f32)             # rows where x[i-1] is inside the image
    mask_p1 = (h_idx < hc - 1).astype(f32)         # rows where x[i+1] is inside the image

    def shift_rows(x, dh):                         # shifted[i] = x[i+dh], 0 outside image
        rolled = pltpu.roll(x, shift=(-dh) % nh, axis=0)      # XLU sublane rotate
        return rolled * (mask_m1 if dh < 0 else mask_p1)

    # ---- ConvTranspose2d(k=2,s=2) + bilinear(align_corners=True): 4 bf16 MXU dots.
    x2 = x2_ref[...]                               # (N*Hx, 128) bf16, K zero-padded
    up = jnp.dot(lh_ref[0],
                 jnp.dot(x2, rw_ref[0], preferred_element_type=f32).astype(bf16),
                 preferred_element_type=f32)
    up = up + jnp.dot(lh_ref[1],
                      jnp.dot(x2, rw_ref[1], preferred_element_type=f32).astype(bf16),
                      preferred_element_type=f32)
    up = up + bt_ref[...]                          # ConvTranspose bias (constant thru interp)

    # ---- conv1 on cat([x_copy, up]) as ONE long-K dot: K = 3*(Wc*Cskip + Wc*Cout).
    # Skip-connection shifted copies were precomputed in the wrapper (xc3); the upsampled
    # path's shifted copies are built here with rolls + masks.  `up` (f32) is dead after.
    up3 = jnp.concatenate([shift_rows(up, -1).astype(bf16),
                           up.astype(bf16),
                           shift_rows(up, 1).astype(bf16)], axis=1)
    c1_in = jnp.concatenate([xc3_ref[...], up3], axis=1)                    # (N*Hc, 768)
    acc1 = jnp.dot(c1_in, g1_ref[...], preferred_element_type=f32)
    h1 = _bn_relu_slab(acc1, bn1g_ref[...], bn1b_ref[...],
                       eps=eps, count=count, cout=cout, wgroups=wc)

    # ---- conv2 as ONE long-K dot: K = 3*Wc*Cout.
    h13 = jnp.concatenate([shift_rows(h1, -1).astype(bf16),
                           h1.astype(bf16),
                           shift_rows(h1, 1).astype(bf16)], axis=1)         # (N*Hc, 384)
    acc2 = jnp.dot(h13, g2_ref[...], preferred_element_type=f32)
    out = _bn_relu_slab(acc2, bn2g_ref[...], bn2b_ref[...],
                        eps=eps, count=count, cout=cout, wgroups=wc)

    o_ref[...] = out.astype(o_ref.dtype)


# --------------------------------------------------------------------------------------
# Wrapper: build the folded weight matrices and call the kernel.
# --------------------------------------------------------------------------------------
def _interp_matrix(src_len, dst_len):
    """(dst_len, src_len) bilinear resize matrix with align_corners=True."""
    scale = (src_len - 1) / (dst_len - 1)
    pos = jnp.arange(dst_len, dtype=jnp.float32) * scale
    i0 = jnp.clip(jnp.floor(pos).astype(jnp.int32), 0, src_len - 1)
    i1 = jnp.minimum(i0 + 1, src_len - 1)
    f = pos - i0.astype(jnp.float32)
    return (jax.nn.one_hot(i0, src_len, dtype=jnp.float32) * (1.0 - f)[:, None]
            + jax.nn.one_hot(i1, src_len, dtype=jnp.float32) * f[:, None])


def _conv_width_matrices(w_spatial, w_hwio):
    """For a 3x3 HWIO kernel return (3, W*Cin, W*Cout): one width-banded ("width-im2col")
    weight matrix per kernel row, so conv over (w, cin) is a single big-K matmul."""
    cin, cout = w_hwio.shape[2], w_hwio.shape[3]
    mats = []
    for kh in range(3):
        g = jnp.zeros((w_spatial * cin, w_spatial * cout), jnp.float32)
        for kw in range(3):
            dw = kw - 1
            band = jnp.eye(w_spatial, k=-dw, dtype=jnp.float32)  # band[w_in, w_out]: w_in = w_out + dw
            g = g + jnp.kron(band, w_hwio[kh, kw].astype(jnp.float32))
        mats.append(g)
    return jnp.stack(mats)


def _shift_rows_host(x_nhwc, dh):
    """shifted[:, h] = x[:, h+dh] with zero rows at image boundaries (pure JAX)."""
    z = jnp.zeros_like(x_nhwc[:, :1])
    if dh < 0:
        return jnp.concatenate([z, x_nhwc[:, :dh]], axis=1)
    return jnp.concatenate([x_nhwc[:, dh:], z], axis=1)


@jax.jit
def decoder_forward(x_copy, x, wt, bt, w1, bn1_gamma, bn1_beta,
                    w2, bn2_gamma, bn2_beta):
    """Forward of PGGNet `decoder` (interpolate=True path), NHWC / HWIO layout.

    x_copy : (N, Hc, Wc, Cskip)   skip connection
    x      : (N, Hx, Wx, Cin)     low-res features
    wt     : (2, 2, Cin, Cout)    ConvTranspose2d weight (PyTorch weight[ci,co,a,b] -> wt[a,b,ci,co])
    w1     : (3, 3, Cin, Cout)    first up_conv Conv2d weight;  Cin == Cskip + Cout
    w2     : (3, 3, Cout, Cout)   second up_conv Conv2d weight
    """
    n, hc, wc, cskip = x_copy.shape
    _, hx, wx, cin = x.shape
    cout = wt.shape[-1]
    assert cskip + cout == cin == w1.shape[2]
    assert wc & (wc - 1) == 0, "lane-rotation BN reduction assumes power-of-two width"
    f32, bf16 = jnp.float32, jnp.bfloat16

    # --- fold ConvTranspose(k2,s2) + bilinear resize into 2 row- and 2 col- matrices.
    ah = _interp_matrix(2 * hx, hc)                                    # (Hc, 2Hx)
    aw = _interp_matrix(2 * wx, wc)                                    # (Wc, 2Wx)
    k_up = wx * cin
    k_pad = -(-k_up // 128) * 128                                      # pad upsample K to lane multiple
    lh, rw = [], []
    for a in range(2):                             # output-row parity of the transposed conv
        lh.append(jnp.kron(jnp.eye(n, dtype=f32), ah[:, a::2]))        # (N*Hc, N*Hx)
        r = jnp.zeros((wx, cin, wc, cout), f32)
        for b in range(2):
            r = r + jnp.einsum('oj,cd->jcod', aw[:, b::2], wt[a, b].astype(f32))
        r = r.reshape(k_up, wc * cout)
        rw.append(jnp.pad(r, ((0, k_pad - k_up), (0, 0))))             # (k_pad, Wc*Cout)
    lh = jnp.stack(lh).astype(bf16)                                    # (2, N*Hc, N*Hx)  bf16
    rw = jnp.stack(rw).astype(bf16)                                    # (2, k_pad, Wc*Cout)
    bt_row = jnp.tile(bt.astype(f32), wc)[None, :]                     # (1, Wc*Cout)

    # --- 3x3 convs: width-banded matmul weights, stacked over (kernel row, channel group)
    #     along K so each conv is a single long-K MXU dot in the kernel.
    g1s = _conv_width_matrices(wc, w1[:, :, :cskip, :])                # (3, Wc*Cskip, Wc*Cout)
    g1u = _conv_width_matrices(wc, w1[:, :, cskip:, :])                # (3, Wc*Cout,  Wc*Cout)
    g2m = _conv_width_matrices(wc, w2)                                 # (3, Wc*Cout,  Wc*Cout)
    g1 = jnp.concatenate([g1s[0], g1s[1], g1s[2],
                          g1u[0], g1u[1], g1u[2]], axis=0).astype(bf16)   # (768, Wc*Cout)
    g2 = jnp.concatenate([g2m[0], g2m[1], g2m[2]], axis=0).astype(bf16)   # (384, Wc*Cout)

    # --- lane-dense 2-D slabs (contiguous reshapes; channels stay minor-most).
    x2 = jnp.pad(x.reshape(n * hx, k_up), ((0, 0), (0, k_pad - k_up))).astype(bf16)
    flat = lambda z: z.reshape(n * hc, wc * cskip)
    xc3 = jnp.concatenate([flat(_shift_rows_host(x_copy, -1)),
                           flat(x_copy),
                           flat(_shift_rows_host(x_copy, 1))], axis=1).astype(bf16)

    # --- BN affine params pre-tiled to one lane row each.
    bn1g_t = jnp.tile(bn1_gamma.astype(f32), wc)[None, :]
    bn1b_t = jnp.tile(bn1_beta.astype(f32), wc)[None, :]
    bn2g_t = jnp.tile(bn2_gamma.astype(f32), wc)[None, :]
    bn2b_t = jnp.tile(bn2_beta.astype(f32), wc)[None, :]

    kernel = functools.partial(_decoder_kernel, eps=_BN_EPS, count=float(n * hc * wc),
                               hc=hc, cout=cout, wc=wc)
    full = lambda shape: pl.BlockSpec(shape, lambda i: (0,) * len(shape))

    out2 = pl.pallas_call(
        kernel,
        out_shape=jax.ShapeDtypeStruct((n * hc, wc * cout), jnp.float32),
        grid=(1,),
        in_specs=[
            full(x2.shape), full(xc3.shape), full(lh.shape), full(rw.shape),
            full(bt_row.shape), full(g1.shape), full(g2.shape),
            full(bn1g_t.shape), full(bn1b_t.shape), full(bn2g_t.shape), full(bn2b_t.shape),
        ],
        out_specs=full((n * hc, wc * cout)),
        compiler_params=pltpu.CompilerParams(
            # Single grid step: training-mode BN statistics are global over (N, H, W), so
            # there is no independent axis to shard without partial-sum BN.  For real
            # PGGNet sizes: tile rows, accumulate BN sum/sumsq per tile, finalize with
            # pl.when on the last step, and mark the row axis "parallel"/core-parallel.
            dimension_semantics=("arbitrary",),
        ),
    )(x2, xc3, lh, rw, bt_row, g1, g2, bn1g_t, bn1b_t, bn2g_t, bn2b_t)

    return out2.reshape(n, hc, wc, cout)


# --------------------------------------------------------------------------------------
# Pure-JAX reference (independent implementation, f32 everywhere).
# --------------------------------------------------------------------------------------
def _resize_bilinear_align_corners(x, ho, wo):
    _, hi, wi, _ = x.shape

    def weights(li, lo):
        s = (li - 1) / (lo - 1)
        src = jnp.arange(lo, dtype=jnp.float32) * s
        i0 = jnp.clip(jnp.floor(src).astype(jnp.int32), 0, li - 1)
        i1 = jnp.minimum(i0 + 1, li - 1)
        return i0, i1, src - i0.astype(jnp.float32)

    h0, h1, fh = weights(hi, ho)
    w0, w1, fw = weights(wi, wo)
    xh = x[:, h0] * (1.0 - fh)[None, :, None, None] + x[:, h1] * fh[None, :, None, None]
    return (xh[:, :, w0] * (1.0 - fw)[None, None, :, None]
            + xh[:, :, w1] * fw[None, None, :, None])


def _ref_decoder(x_copy, x, wt, bt, w1, b1, w2, b2, g1, be1, g2, be2, eps=_BN_EPS):
    n, hc, wc, _ = x_copy.shape
    _, hx, wx, _ = x.shape
    cout = wt.shape[-1]
    # ConvTranspose2d(k=2, s=2): out[n, 2i+a, 2j+b, co] = sum_ci x[n,i,j,ci] wt[a,b,ci,co] + bt
    up = jnp.einsum('nijc,abcd->niajbd', x, wt).reshape(n, 2 * hx, 2 * wx, cout) + bt
    up = _resize_bilinear_align_corners(up, hc, wc)
    y = jnp.concatenate([x_copy, up], axis=-1)

    def conv_bn_relu(z, w, b, gamma, beta):
        z = jax.lax.conv_general_dilated(
            z, w, window_strides=(1, 1), padding=((1, 1), (1, 1)),
            dimension_numbers=("NHWC", "HWIO", "NHWC")) + b
        m = jnp.mean(z, axis=(0, 1, 2), keepdims=True)
        v = jnp.mean((z - m) ** 2, axis=(0, 1, 2), keepdims=True)
        return jnp.maximum((z - m) * jax.lax.rsqrt(v + eps) * gamma + beta, 0.0)

    y = conv_bn_relu(y, w1, b1, g1, be1)
    y = conv_bn_relu(y, w2, b2, g2, be2)
    return y


# --------------------------------------------------------------------------------------
if __name__ == "__main__":
    N = 2
    CIN, COUT = 8, 4            # decoder(in_channels=8, out_channels=4)
    CSKIP = CIN - COUT          # skip-connection channels so that cat -> CIN channels
    HX = WX = 12                # low-res feature map "x"
    HC = WC = 32                # "x_copy" resolution; WC*COUT = 128 -> lane-dense slabs

    key = jax.random.PRNGKey(0)
    ks = jax.random.split(key, 12)
    x_copy = jax.random.normal(ks[0], (N, HC, WC, CSKIP), jnp.float32)
    x = jax.random.normal(ks[1], (N, HX, WX, CIN), jnp.float32)

    wt = jax.random.normal(ks[2], (2, 2, CIN, COUT), jnp.float32) * (1.0 / (4 * CIN)) ** 0.5
    bt = 0.1 * jax.random.normal(ks[3], (COUT,), jnp.float32)
    w1 = jax.random.normal(ks[4], (3, 3, CIN, COUT), jnp.float32) * (2.0 / (9 * CIN)) ** 0.5
    b1 = 0.05 * jax.random.normal(ks[5], (COUT,), jnp.float32)   # cancelled by BN; ref only
    w2 = jax.random.normal(ks[6], (3, 3, COUT, COUT), jnp.float32) * (2.0 / (9 * COUT)) ** 0.5
    b2 = 0.05 * jax.random.normal(ks[7], (COUT,), jnp.float32)   # cancelled by BN; ref only
    bn1_g = 1.0 + 0.1 * jax.random.normal(ks[8], (COUT,), jnp.float32)
    bn1_b = 0.05 * jax.random.normal(ks[9], (COUT,), jnp.float32)
    bn2_g = 1.0 + 0.1 * jax.random.normal(ks[10], (COUT,), jnp.float32)
    bn2_b = 0.05 * jax.random.normal(ks[11], (COUT,), jnp.float32)

    out = decoder_forward(x_copy, x, wt, bt, w1, bn1_g, bn1_b, w2, bn2_g, bn2_b)
    out = jax.block_until_ready(out)

    ref = jax.block_until_ready(
        _ref_decoder(x_copy, x, wt, bt, w1, b1, w2, b2, bn1_g, bn1_b, bn2_g, bn2_b))

    assert out.shape == (N, HC, WC, COUT)
    err = float(jnp.max(jnp.abs(out - ref)))
    # bf16 MXU operands (f32 accumulation) vs an all-f32 reference -> percent-level tolerance.
    assert jnp.allclose(out, ref, rtol=5e-2, atol=5e-2), err
    print("KERNEL_OK")
</pallas_src>

<mosaic_0001>
module attributes {stable_mosaic.version = 11 : i64} {
  func.func @_decoder_kernel(%arg0: i32, %arg1: memref<24x128xbf16, #tpu.memory_space<vmem>>, %arg2: memref<64x384xbf16, #tpu.memory_space<vmem>>, %arg3: memref<2x64x24xbf16, #tpu.memory_space<vmem>>, %arg4: memref<2x128x128xbf16, #tpu.memory_space<vmem>>, %arg5: memref<1x128xf32, #tpu.memory_space<vmem>>, %arg6: memref<768x128xbf16, #tpu.memory_space<vmem>>, %arg7: memref<384x128xbf16, #tpu.memory_space<vmem>>, %arg8: memref<1x128xf32, #tpu.memory_space<vmem>>, %arg9: memref<1x128xf32, #tpu.memory_space<vmem>>, %arg10: memref<1x128xf32, #tpu.memory_space<vmem>>, %arg11: memref<1x128xf32, #tpu.memory_space<vmem>>, %arg12: memref<64x128xf32, #tpu.memory_space<vmem>>) attributes {dimension_semantics = [#tpu.dimension_semantics<arbitrary>], iteration_bounds = array<i64: 1>, scalar_prefetch = 0 : i64, scratch_operands = 0 : i64, tpu.core_type = #tpu.core_type<tc>, window_params = [{pipeline_mode = #tpu.pipeline_mode<synchronous>, transform_indices = @transform_0, window_bounds = array<i64: 24, 128>}, {pipeline_mode = #tpu.pipeline_mode<synchronous>, transform_indices = @transform_1, window_bounds = array<i64: 64, 384>}, {pipeline_mode = #tpu.pipeline_mode<synchronous>, transform_indices = @transform_2, window_bounds = array<i64: 2, 64, 24>}, {pipeline_mode = #tpu.pipeline_mode<synchronous>, transform_indices = @transform_3, window_bounds = array<i64: 2, 128, 128>}, {pipeline_mode = #tpu.pipeline_mode<synchronous>, transform_indices = @transform_4, window_bounds = array<i64: 1, 128>}, {pipeline_mode = #tpu.pipeline_mode<synchronous>, transform_indices = @transform_5, window_bounds = array<i64: 768, 128>}, {pipeline_mode = #tpu.pipeline_mode<synchronous>, transform_indices = @transform_6, window_bounds = array<i64: 384, 128>}, {pipeline_mode = #tpu.pipeline_mode<synchronous>, transform_indices = @transform_7, window_bounds = array<i64: 1, 128>}, {pipeline_mode = #tpu.pipeline_mode<synchronous>, transform_indices = @transform_8, window_bounds = array<i64: 1, 128>}, {pipeline_mode = #tpu.pipeline_mode<synchronous>, transform_indices = @transform_9, window_bounds = array<i64: 1, 128>}, {pipeline_mode = #tpu.pipeline_mode<synchronous>, transform_indices = @transform_10, window_bounds = array<i64: 1, 128>}, {pipeline_mode = #tpu.pipeline_mode<synchronous>, transform_indices = @transform_11, window_bounds = array<i64: 64, 128>}]} {
    %0 = tpu.iota {dimensions = array<i32: 0>} : vector<64x1xi32>
    %c32_i32 = arith.constant 32 : i32
    %c0_i32 = arith.constant 0 : i32
    %1 = arith.cmpi eq, %c32_i32, %c0_i32 : i32
    %c1_i32 = arith.constant 1 : i32
    %2 = arith.select %1, %c1_i32, %c32_i32 : i32
    %3 = vector.broadcast %2 : i32 to vector<64x1xi32>
    %4 = arith.remsi %0, %3 : vector<64x1xi32>
    %c0_i32_0 = arith.constant 0 : i32
    %5 = vector.broadcast %c0_i32_0 : i32 to vector<64x1xi32>
    %6 = arith.cmpi ne, %4, %5 : vector<64x1xi32>
    %c0_i32_1 = arith.constant 0 : i32
    %7 = vector.broadcast %c0_i32_1 : i32 to vector<64x1xi32>
    %8 = arith.cmpi slt, %4, %7 : vector<64x1xi32>
    %c0_i32_2 = arith.constant 0 : i32
    %9 = arith.cmpi slt, %2, %c0_i32_2 : i32
    %10 = vector.broadcast %9 : i1 to vector<64x1xi1>
    %11 = vector.broadcast %10 : vector<64x1xi1> to vector<64x1xi1>
    %12 = arith.xori %8, %11 : vector<64x1xi1>
    %13 = arith.andi %12, %6 : vector<64x1xi1>
    %14 = vector.broadcast %2 : i32 to vector<64x1xi32>
    %15 = arith.addi %4, %14 : vector<64x1xi32>
    %16 = arith.select %13, %15, %4 : vector<64x1xi1>, vector<64x1xi32>
    %c1_i32_3 = arith.constant 1 : i32
    %17 = vector.broadcast %c1_i32_3 : i32 to vector<64x1xi32>
    %18 = arith.cmpi sge, %16, %17 : vector<64x1xi32>
    %19 = arith.extui %18 : vector<64x1xi1> to vector<64x1xi32>
    %20 = arith.sitofp %19 : vector<64x1xi32> to vector<64x1xf32>
    %c31_i32 = arith.constant 31 : i32
    %21 = vector.broadcast %c31_i32 : i32 to vector<64x1xi32>
    %22 = arith.cmpi slt, %16, %21 : vector<64x1xi32>
    %23 = arith.extui %22 : vector<64x1xi1> to vector<64x1xi32>
    %24 = arith.sitofp %23 : vector<64x1xi32> to vector<64x1xf32>
    %c0 = arith.constant 0 : index
    %c0_4 = arith.constant 0 : index
    %25 = vector.load %arg1[%c0, %c0_4] : memref<24x128xbf16, #tpu.memory_space<vmem>>, vector<24x128xbf16>
    %c0_5 = arith.constant 0 : index
    %c0_6 = arith.constant 0 : index
    %c0_7 = arith.constant 0 : index
    %26 = vector.load %arg3[%c0_5, %c0_6, %c0_7] : memref<2x64x24xbf16, #tpu.memory_space<vmem>>, vector<1x64x24xbf16>
    %27 = vector.shape_cast %26 : vector<1x64x24xbf16> to vector<64x24xbf16>
    %c0_8 = arith.constant 0 : index
    %c0_9 = arith.constant 0 : index
    %c0_10 = arith.constant 0 : index
    %28 = vector.load %arg4[%c0_8, %c0_9, %c0_10] : memref<2x128x128xbf16, #tpu.memory_space<vmem>>, vector<1x128x128xbf16>
    %29 = vector.shape_cast %28 : vector<1x128x128xbf16> to vector<128x128xbf16>
    %cst = arith.constant dense<0.000000e+00> : vector<24x128xf32>
    %30 = tpu.matmul %25, %29, %cst {dimension_numbers = #tpu.dot_dimension_numbers<[1], [0], [0], [1], [0, 0, 1, 1], [], []>} : vector<24x128xbf16>, vector<128x128xbf16>, vector<24x128xf32> -> vector<24x128xf32>
    %31 = arith.truncf %30 : vector<24x128xf32> to vector<24x128xbf16>
    %cst_11 = arith.constant dense<0.000000e+00> : vector<64x128xf32>
    %32 = tpu.matmul %27, %31, %cst_11 {dimension_numbers = #tpu.dot_dimension_numbers<[1], [0], [0], [1], [0, 0, 1, 1], [], []>} : vector<64x24xbf16>, vector<24x128xbf16>, vector<64x128xf32> -> vector<64x128xf32>
    %c1 = arith.constant 1 : index
    %c0_12 = arith.constant 0 : index
    %c0_13 = arith.constant 0 : index
    %33 = vector.load %arg3[%c1, %c0_12, %c0_13] : memref<2x64x24xbf16, #tpu.memory_space<vmem>>, vector<1x64x24xbf16>
    %34 = vector.shape_cast %33 : vector<1x64x24xbf16> to vector<64x24xbf16>
    %c1_14 = arith.constant 1 : index
    %c0_15 = arith.constant 0 : index
    %c0_16 = arith.constant 0 : index
    %35 = vector.load %arg4[%c1_14, %c0_15, %c0_16] : memref<2x128x128xbf16, #tpu.memory_space<vmem>>, vector<1x128x128xbf16>
    %36 = vector.shape_cast %35 : vector<1x128x128xbf16> to vector<128x128xbf16>
    %cst_17 = arith.constant dense<0.000000e+00> : vector<24x128xf32>
    %37 = tpu.matmul %25, %36, %cst_17 {dimension_numbers = #tpu.dot_dimension_numbers<[1], [0], [0], [1], [0, 0, 1, 1], [], []>} : vector<24x128xbf16>, vector<128x128xbf16>, vector<24x128xf32> -> vector<24x128xf32>
    %38 = arith.truncf %37 : vector<24x128xf32> to vector<24x128xbf16>
    %cst_18 = arith.constant dense<0.000000e+00> : vector<64x128xf32>
    %39 = tpu.matmul %34, %38, %cst_18 {dimension_numbers = #tpu.dot_dimension_numbers<[1], [0], [0], [1], [0, 0, 1, 1], [], []>} : vector<64x24xbf16>, vector<24x128xbf16>, vector<64x128xf32> -> vector<64x128xf32>
    %40 = arith.addf %32, %39 : vector<64x128xf32>
    %c0_19 = arith.constant 0 : index
    %c0_20 = arith.constant 0 : index
    %41 = vector.load %arg5[%c0_19, %c0_20] : memref<1x128xf32, #tpu.memory_space<vmem>>, vector<1x128xf32>
    %42 = vector.broadcast %41 : vector<1x128xf32> to vector<64x128xf32>
    %43 = arith.addf %40, %42 : vector<64x128xf32>
    %c1_i32_21 = arith.constant 1 : i32
    %44 = tpu.dynamic_rotate %43 by %c1_i32_21 dim 0 : vector<64x128xf32>, i32 -> vector<64x128xf32>
    %45 = vector.broadcast %20 : vector<64x1xf32> to vector<64x128xf32>
    %46 = arith.mulf %44, %45 : vector<64x128xf32>
    %47 = arith.truncf %46 : vector<64x128xf32> to vector<64x128xbf16>
    %48 = arith.truncf %43 : vector<64x128xf32> to vector<64x128xbf16>
    %c63_i32 = arith.constant 63 : i32
    %49 = tpu.dynamic_rotate %43 by %c63_i32 dim 0 : vector<64x128xf32>, i32 -> vector<64x128xf32>
    %50 = vector.broadcast %24 : vector<64x1xf32> to vector<64x128xf32>
    %51 = arith.mulf %49, %50 : vector<64x128xf32>
    %52 = arith.truncf %51 : vector<64x128xf32> to vector<64x128xbf16>
    %53 = tpu.concatenate %47, %48, %52 in 1 : vector<64x128xbf16>, vector<64x128xbf16>, vector<64x128xbf16> -> vector<64x384xbf16>
    %c0_22 = arith.constant 0 : index
    %c0_23 = arith.constant 0 : index
    %54 = vector.load %arg2[%c0_22, %c0_23] : memref<64x384xbf16, #tpu.memory_space<vmem>>, vector<64x384xbf16>
    %55 = tpu.concatenate %54, %53 in 1 : vector<64x384xbf16>, vector<64x384xbf16> -> vector<64x768xbf16>
    %c0_24 = arith.constant 0 : index
    %c0_25 = arith.constant 0 : index
    %56 = vector.load %arg6[%c0_24, %c0_25] : memref<768x128xbf16, #tpu.memory_space<vmem>>, vector<768x128xbf16>
    %cst_26 = arith.constant dense<0.000000e+00> : vector<64x128xf32>
    %57 = tpu.matmul %55, %56, %cst_26 {dimension_numbers = #tpu.dot_dimension_numbers<[1], [0], [0], [1], [0, 0, 1, 1], [], []>} : vector<64x768xbf16>, vector<768x128xbf16>, vector<64x128xf32> -> vector<64x128xf32>
    %c0_27 = arith.constant 0 : index
    %c0_28 = arith.constant 0 : index
    %58 = vector.load %arg8[%c0_27, %c0_28] : memref<1x128xf32, #tpu.memory_space<vmem>>, vector<1x128xf32>
    %c0_29 = arith.constant 0 : index
    %c0_30 = arith.constant 0 : index
    %59 = vector.load %arg9[%c0_29, %c0_30] : memref<1x128xf32, #tpu.memory_space<vmem>>, vector<1x128xf32>
    %cst_31 = arith.constant dense<0.000000e+00> : vector<128xf32>
    %60 = vector.multi_reduction <add>, %57, %cst_31 [0] : vector<64x128xf32> to vector<128xf32>
    %61 = vector.shape_cast %60 : vector<128xf32> to vector<1x128xf32>
    %62 = arith.mulf %57, %57 : vector<64x128xf32>
    %cst_32 = arith.constant dense<0.000000e+00> : vector<128xf32>
    %63 = vector.multi_reduction <add>, %62, %cst_32 [0] : vector<64x128xf32> to vector<128xf32>
    %64 = vector.shape_cast %63 : vector<128xf32> to vector<1x128xf32>
    %65 = tpu.concatenate %61, %64 in 0 : vector<1x128xf32>, vector<1x128xf32> -> vector<2x128xf32>
    %c4_i32 = arith.constant 4 : i32
    %66 = tpu.dynamic_rotate %65 by %c4_i32 dim 1 : vector<2x128xf32>, i32 -> vector<2x128xf32>
    %67 = arith.addf %65, %66 : vector<2x128xf32>
    %c8_i32 = arith.constant 8 : i32
    %68 = tpu.dynamic_rotate %67 by %c8_i32 dim 1 : vector<2x128xf32>, i32 -> vector<2x128xf32>
    %69 = arith.addf %67, %68 : vector<2x128xf32>
    %c16_i32 = arith.constant 16 : i32
    %70 = tpu.dynamic_rotate %69 by %c16_i32 dim 1 : vector<2x128xf32>, i32 -> vector<2x128xf32>
    %71 = arith.addf %69, %70 : vector<2x128xf32>
    %c32_i32_33 = arith.constant 32 : i32
    %72 = tpu.dynamic_rotate %71 by %c32_i32_33 dim 1 : vector<2x128xf32>, i32 -> vector<2x128xf32>
    %73 = arith.addf %71, %72 : vector<2x128xf32>
    %c64_i32 = arith.constant 64 : i32
    %74 = tpu.dynamic_rotate %73 by %c64_i32 dim 1 : vector<2x128xf32>, i32 -> vector<2x128xf32>
    %75 = arith.addf %73, %74 : vector<2x128xf32>
    %76 = vector.extract_strided_slice %75 {offsets = [0, 0], sizes = [1, 128], strides = [1, 1]} : vector<2x128xf32> to vector<1x128xf32>
    %cst_34 = arith.constant 4.8828125E-4 : f32
    %77 = vector.broadcast %cst_34 : f32 to vector<1x128xf32>
    %78 = arith.mulf %76, %77 : vector<1x128xf32>
    %79 = vector.extract_strided_slice %75 {offsets = [1, 0], sizes = [1, 128], strides = [1, 1]} : vector<2x128xf32> to vector<1x128xf32>
    %cst_35 = arith.constant 4.8828125E-4 : f32
    %80 = vector.broadcast %cst_35 : f32 to vector<1x128xf32>
    %81 = arith.mulf %79, %80 : vector<1x128xf32>
    %82 = arith.mulf %78, %78 : vector<1x128xf32>
    %83 = arith.subf %81, %82 : vector<1x128xf32>
    %cst_36 = arith.constant 0.000000e+00 : f32
    %84 = vector.broadcast %cst_36 : f32 to vector<1x128xf32>
    %85 = arith.maximumf %83, %84 : vector<1x128xf32>
    %cst_37 = arith.constant 9.99999974E-6 : f32
    %86 = vector.broadcast %cst_37 : f32 to vector<1x128xf32>
    %87 = arith.addf %85, %86 : vector<1x128xf32>
    %88 = math.rsqrt %87 : vector<1x128xf32>
    %89 = arith.mulf %58, %88 : vector<1x128xf32>
    %90 = arith.mulf %78, %89 : vector<1x128xf32>
    %91 = arith.subf %59, %90 : vector<1x128xf32>
    %92 = vector.broadcast %89 : vector<1x128xf32> to vector<64x128xf32>
    %93 = arith.mulf %57, %92 : vector<64x128xf32>
    %94 = vector.broadcast %91 : vector<1x128xf32> to vector<64x128xf32>
    %95 = arith.addf %93, %94 : vector<64x128xf32>
    %cst_38 = arith.constant 0.000000e+00 : f32
    %96 = vector.broadcast %cst_38 : f32 to vector<64x128xf32>
    %97 = arith.maximumf %95, %96 : vector<64x128xf32>
    %c1_i32_39 = arith.constant 1 : i32
    %98 = tpu.dynamic_rotate %97 by %c1_i32_39 dim 0 : vector<64x128xf32>, i32 -> vector<64x128xf32>
    %99 = vector.broadcast %20 : vector<64x1xf32> to vector<64x128xf32>
    %100 = arith.mulf %98, %99 : vector<64x128xf32>
    %101 = arith.truncf %100 : vector<64x128xf32> to vector<64x128xbf16>
    %102 = arith.truncf %97 : vector<64x128xf32> to vector<64x128xbf16>
    %c63_i32_40 = arith.constant 63 : i32
    %103 = tpu.dynamic_rotate %97 by %c63_i32_40 dim 0 : vector<64x128xf32>, i32 -> vector<64x128xf32>
    %104 = vector.broadcast %24 : vector<64x1xf32> to vector<64x128xf32>
    %105 = arith.mulf %103, %104 : vector<64x128xf32>
    %106 = arith.truncf %105 : vector<64x128xf32> to vector<64x128xbf16>
    %107 = tpu.concatenate %101, %102, %106 in 1 : vector<64x128xbf16>, vector<64x128xbf16>, vector<64x128xbf16> -> vector<64x384xbf16>
    %c0_41 = arith.constant 0 : index
    %c0_42 = arith.constant 0 : index
    %108 = vector.load %arg7[%c0_41, %c0_42] : memref<384x128xbf16, #tpu.memory_space<vmem>>, vector<384x128xbf16>
    %cst_43 = arith.constant dense<0.000000e+00> : vector<64x128xf32>
    %109 = tpu.matmul %107, %108, %cst_43 {dimension_numbers = #tpu.dot_dimension_numbers<[1], [0], [0], [1], [0, 0, 1, 1], [], []>} : vector<64x384xbf16>, vector<384x128xbf16>, vector<64x128xf32> -> vector<64x128xf32>
    %c0_44 = arith.constant 0 : index
    %c0_45 = arith.constant 0 : index
    %110 = vector.load %arg10[%c0_44, %c0_45] : memref<1x128xf32, #tpu.memory_space<vmem>>, vector<1x128xf32>
    %c0_46 = arith.constant 0 : index
    %c0_47 = arith.constant 0 : index
    %111 = vector.load %arg11[%c0_46, %c0_47] : memref<1x128xf32, #tpu.memory_space<vmem>>, vector<1x128xf32>
    %cst_48 = arith.constant dense<0.000000e+00> : vector<128xf32>
    %112 = vector.multi_reduction <add>, %109, %cst_48 [0] : vector<64x128xf32> to vector<128xf32>
    %113 = vector.shape_cast %112 : vector<128xf32> to vector<1x128xf32>
    %114 = arith.mulf %109, %109 : vector<64x128xf32>
    %cst_49 = arith.constant dense<0.000000e+00> : vector<128xf32>
    %115 = vector.multi_reduction <add>, %114, %cst_49 [0] : vector<64x128xf32> to vector<128xf32>
    %116 = vector.shape_cast %115 : vector<128xf32> to vector<1x128xf32>
    %117 = tpu.concatenate %113, %116 in 0 : vector<1x128xf32>, vector<1x128xf32> -> vector<2x128xf32>
    %c4_i32_50 = arith.constant 4 : i32
    %118 = tpu.dynamic_rotate %117 by %c4_i32_50 dim 1 : vector<2x128xf32>, i32 -> vector<2x128xf32>
    %119 = arith.addf %117, %118 : vector<2x128xf32>
    %c8_i32_51 = arith.constant 8 : i32
    %120 = tpu.dynamic_rotate %119 by %c8_i32_51 dim 1 : vector<2x128xf32>, i32 -> vector<2x128xf32>
    %121 = arith.addf %119, %120 : vector<2x128xf32>
    %c16_i32_52 = arith.constant 16 : i32
    %122 = tpu.dynamic_rotate %121 by %c16_i32_52 dim 1 : vector<2x128xf32>, i32 -> vector<2x128xf32>
    %123 = arith.addf %121, %122 : vector<2x128xf32>
    %c32_i32_53 = arith.constant 32 : i32
    %124 = tpu.dynamic_rotate %123 by %c32_i32_53 dim 1 : vector<2x128xf32>, i32 -> vector<2x128xf32>
    %125 = arith.addf %123, %124 : vector<2x128xf32>
    %c64_i32_54 = arith.constant 64 : i32
    %126 = tpu.dynamic_rotate %125 by %c64_i32_54 dim 1 : vector<2x128xf32>, i32 -> vector<2x128xf32>
    %127 = arith.addf %125, %126 : vector<2x128xf32>
    %128 = vector.extract_strided_slice %127 {offsets = [0, 0], sizes = [1, 128], strides = [1, 1]} : vector<2x128xf32> to vector<1x128xf32>
    %cst_55 = arith.constant 4.8828125E-4 : f32
    %129 = vector.broadcast %cst_55 : f32 to vector<1x128xf32>
    %130 = arith.mulf %128, %129 : vector<1x128xf32>
    %131 = vector.extract_strided_slice %127 {offsets = [1, 0], sizes = [1, 128], strides = [1, 1]} : vector<2x128xf32> to vector<1x128xf32>
    %cst_56 = arith.constant 4.8828125E-4 : f32
    %132 = vector.broadcast %cst_56 : f32 to vector<1x128xf32>
    %133 = arith.mulf %131, %132 : vector<1x128xf32>
    %134 = arith.mulf %130, %130 : vector<1x128xf32>
    %135 = arith.subf %133, %134 : vector<1x128xf32>
    %cst_57 = arith.constant 0.000000e+00 : f32
    %136 = vector.broadcast %cst_57 : f32 to vector<1x128xf32>
    %137 = arith.maximumf %135, %136 : vector<1x128xf32>
    %cst_58 = arith.constant 9.99999974E-6 : f32
    %138 = vector.broadcast %cst_58 : f32 to vector<1x128xf32>
    %139 = arith.addf %137, %138 : vector<1x128xf32>
    %140 = math.rsqrt %139 : vector<1x128xf32>
    %141 = arith.mulf %110, %140 : vector<1x128xf32>
    %142 = arith.mulf %130, %141 : vector<1x128xf32>
    %143 = arith.subf %111, %142 : vector<1x128xf32>
    %144 = vector.broadcast %141 : vector<1x128xf32> to vector<64x128xf32>
    %145 = arith.mulf %109, %144 : vector<64x128xf32>
    %146 = vector.broadcast %143 : vector<1x128xf32> to vector<64x128xf32>
    %147 = arith.addf %145, %146 : vector<64x128xf32>
    %cst_59 = arith.constant 0.000000e+00 : f32
    %148 = vector.broadcast %cst_59 : f32 to vector<64x128xf32>
    %149 = arith.maximumf %147, %148 : vector<64x128xf32>
    %c0_60 = arith.constant 0 : index
    %c0_61 = arith.constant 0 : index
    %150 = vector.load %arg12[%c0_60, %c0_61] : memref<64x128xf32, #tpu.memory_space<vmem>>, vector<64x128xf32>
    tpu.vector_store %arg12[%c0_60, %c0_61], %149 {strides = array<i32>} : memref<64x128xf32, #tpu.memory_space<vmem>>, vector<64x128xf32>,
    return
  }
  func.func @transform_0(%arg0: i32) -> (i32, i32) {
    %c0_i32 = arith.constant 0 : i32
    %c0_i32_0 = arith.constant 0 : i32
    %c0_i32_1 = arith.constant 0 : i32
    return %c0_i32, %c0_i32_0 : i32, i32
  }
  func.func @transform_1(%arg0: i32) -> (i32, i32) {
    %c0_i32 = arith.constant 0 : i32
    %c0_i32_0 = arith.constant 0 : i32
    %c0_i32_1 = arith.constant 0 : i32
    return %c0_i32, %c0_i32_0 : i32, i32
  }
  func.func @transform_2(%arg0: i32) -> (i32, i32, i32) {
    %c0_i32 = arith.constant 0 : i32
    %c0_i32_0 = arith.constant 0 : i32
    %c0_i32_1 = arith.constant 0 : i32
    %c0_i32_2 = arith.constant 0 : i32
    return %c0_i32, %c0_i32_0, %c0_i32_1 : i32, i32, i32
  }
  func.func @transform_3(%arg0: i32) -> (i32, i32, i32) {
    %c0_i32 = arith.constant 0 : i32
    %c0_i32_0 = arith.constant 0 : i32
    %c0_i32_1 = arith.constant 0 : i32
    %c0_i32_2 = arith.constant 0 : i32
    return %c0_i32, %c0_i32_0, %c0_i32_1 : i32, i32, i32
  }
  func.func @transform_4(%arg0: i32) -> (i32, i32) {
    %c0_i32 = arith.constant 0 : i32
    %c0_i32_0 = arith.constant 0 : i32
    %c0_i32_1 = arith.constant 0 : i32
    return %c0_i32, %c0_i32_0 : i32, i32
  }
  func.func @transform_5(%arg0: i32) -> (i32, i32) {
    %c0_i32 = arith.constant 0 : i32
    %c0_i32_0 = arith.constant 0 : i32
    %c0_i32_1 = arith.constant 0 : i32
    return %c0_i32, %c0_i32_0 : i32, i32
  }
  func.func @transform_6(%arg0: i32) -> (i32, i32) {
    %c0_i32 = arith.constant 0 : i32
    %c0_i32_0 = arith.constant 0 : i32
    %c0_i32_1 = arith.constant 0 : i32
    return %c0_i32, %c0_i32_0 : i32, i32
  }
  func.func @transform_7(%arg0: i32) -> (i32, i32) {
    %c0_i32 = arith.constant 0 : i32
    %c0_i32_0 = arith.constant 0 : i32
    %c0_i32_1 = arith.constant 0 : i32
    return %c0_i32, %c0_i32_0 : i32, i32
  }
  func.func @transform_8(%arg0: i32) -> (i32, i32) {
    %c0_i32 = arith.constant 0 : i32
    %c0_i32_0 = arith.constant 0 : i32
    %c0_i32_1 = arith.constant 0 : i32
    return %c0_i32, %c0_i32_0 : i32, i32
  }
  func.func @transform_9(%arg0: i32) -> (i32, i32) {
    %c0_i32 = arith.constant 0 : i32
    %c0_i32_0 = arith.constant 0 : i32
    %c0_i32_1 = arith.constant 0 : i32
    return %c0_i32, %c0_i32_0 : i32, i32
  }
  func.func @transform_10(%arg0: i32) -> (i32, i32) {
    %c0_i32 = arith.constant 0 : i32
    %c0_i32_0 = arith.constant 0 : i32
    %c0_i32_1 = arith.constant 0 : i32
    return %c0_i32, %c0_i32_0 : i32, i32
  }
  func.func @transform_11(%arg0: i32) -> (i32, i32) {
    %c0_i32 = arith.constant 0 : i32
    %c0_i32_0 = arith.constant 0 : i32
    %c0_i32_1 = arith.constant 0 : i32
    return %c0_i32, %c0_i32_0 : i32, i32
  }
}

</mosaic_0001>

<llo_original>
// kernel: tile.28
$region0: #{tile.28}
  #allocation2 [shape = 's32[1]{0}', space=sflag, size = 0x4, scoped, tag = 'scoped memory for tile.28']
  %s0 = inlined_call_operand.hbm [shape: f32[4], index: 0, kind: input, shape index: {}]
  %s1 = inlined_call_operand.vmem [shape: f32[32,4], index: 1, kind: output, shape index: {}]
  $region1: #{tile.28} parent=0
    #allocation0 [shape = 'u8[512]{0}', space=vmem, size = 0x400, scoped, tag = 'operand span for operand 0']
    #allocation1 [shape = 's32[1]{0}', space=sflag, size = 0x4, scoped, tag = 'scoped memory for tile.28']
    %2 = vsyncpa [#allocation1], 0
    // Predicated region
    $region2: #{tile.28} parent=1 // pred_check
      _
    $region3: #{tile.28} parent=1 // pred_check_branch
      %4 = sbr.rel (0) target = $region5
    $region4: #{tile.28} parent=1 // pred_region
      %s6 = ssub.s32 16, 16
      %7 = vsyncadd [#allocation1], %s6
      %s9 = sshll.u32 [#allocation0], 4
      %s10 = int_to_ptr.vmem [resolvable:$true] %s9
      %12 = dma.hbm_to_vmem [thread:$0]  %s0, 16, %s10, [#allocation1]
    $region5: #{tile.28} parent=1 // pred_fallthru
      _
    // Predicated region
    $region6: #{tile.28} parent=1 // pred_check
      _
    $region7: #{tile.28} parent=1 // pred_check_branch
      %14 = sbr.rel (0) target = $region9
    $region8: #{tile.28} parent=1 // pred_region
      %15 = dma.done [#allocation1], 16
    $region9: #{tile.28} parent=1 // pred_fallthru
      _
    %v16 = vld [vmem:[#allocation0] ss:$0 sm:$0xff]
    %17 = vst [vmem:[%s1] sm:$0xff] %v16
    %s18 = scalar_lea.vmem %s1, 8
    %19 = vst [vmem:[%s18] sm:$0xff] %v16
    %s20 = scalar_lea.vmem %s1, 16
    %21 = vst [vmem:[%s20] sm:$0xff] %v16
    %s22 = scalar_lea.vmem %s1, 24
    %23 = vst [vmem:[%s22] sm:$0xff] %v16
    %24 = vsyncpa [#allocation1], 1

// kernel: tile.29
$region0: #{tile.29}
  %s0 = inlined_call_operand.vmem [shape: f32[32,4], index: 0, kind: input, shape index: {}]
  %s1 = inlined_call_operand.vmem [shape: f32[1,128], index: 1, kind: output, shape index: {}]
  $region1: #{tile.29} parent=0
    #allocation0 [shape = 'u8[4096]{0}', space=vmem, size = 0x1000, scoped, tag = 'scoped mem for output reshape']
    %v2 = vld [vmem:[%s0] sm:$0x1]
    %vm3 = vcmask 31744
    %4 = vst.msk [vmem:[#allocation0] sm:$0x1] %vm3, %v2
    %s5 = scalar_lea.vmem %s0, 31
    %v6 = vld [vmem:[%s5] sm:$0x1]
    %7 = vrot.lane.b32.xlu0 %v6, 124
    %v8 = vpop.permute.xlu0 %7
    %vm9 = vcmask 1048544
    %10 = vst.msk [vmem:[#allocation0] sm:$0x1] %vm9, %v8
    %s11 = scalar_lea.vmem %s0, 30
    %v12 = vld [vmem:[%s11] sm:$0x1]
    %13 = vrot.lane.b32.xlu0 %v12, 120
    %v14 = vpop.permute.xlu0 %13
    %vm15 = vcmask 1015744
    %16 = vst.msk [vmem:[#allocation0] sm:$0x1] %vm15, %v14
    %s17 = scalar_lea.vmem %s0, 29
    %v18 = vld [vmem:[%s17] sm:$0x1]
    %19 = vrot.lane.b32.xlu0 %v18, 116
    %v20 = vpop.permute.xlu0 %19
    %vm21 = vcmask 982944
    %22 = vst.msk [vmem:[#allocation0] sm:$0x1] %vm21, %v20
    %s23 = scalar_lea.vmem %s0, 28
    %v24 = vld [vmem:[%s23] sm:$0x1]
    %25 = vrot.lane.b32.xlu0 %v24, 112
    %v26 = vpop.permute.xlu0 %25
    %vm27 = vcmask 950144
    %28 = vst.msk [vmem:[#allocation0] sm:$0x1] %vm27, %v26
    %s29 = scalar_lea.vmem %s0, 27
    %v30 = vld [vmem:[%s29] sm:$0x1]
    %31 = vrot.lane.b32.xlu0 %v30, 108
    %v32 = vpop.permute.xlu0 %31
    %vm33 = vcmask 917344
    %34 = vst.msk [vmem:[#allocation0] sm:$0x1] %vm33, %v32
    %s35 = scalar_lea.vmem %s0, 26
    %v36 = vld [vmem:[%s35] sm:$0x1]
    %37 = vrot.lane.b32.xlu0 %v36, 104
    %v38 = vpop.permute.xlu0 %37
    %vm39 = vcmask 884544
    %40 = vst.msk [vmem:[#allocation0] sm:$0x1] %vm39, %v38
    %s41 = scalar_lea.vmem %s0, 25
    %v42 = vld [vmem:[%s41] sm:$0x1]
    %43 = vrot.lane.b32.xlu0 %v42, 100
    %v44 = vpop.permute.xlu0 %43
    %vm45 = vcmask 851744
    %46 = vst.msk [vmem:[#allocation0] sm:$0x1] %vm45, %v44
    %s47 = scalar_lea.vmem %s0, 24
    %v48 = vld [vmem:[%s47] sm:$0x1]
    %49 = vrot.lane.b32.xlu0 %v48, 96
    %v50 = vpop.permute.xlu0 %49
    %vm51 = vcmask 818944
    %52 = vst.msk [vmem:[#allocation0] sm:$0x1] %vm51, %v50
    %s53 = scalar_lea.vmem %s0, 23
    %v54 = vld [vmem:[%s53] sm:$0x1]
    %55 = vrot.lane.b32.xlu0 %v54, 92
    %v56 = vpop.permute.xlu0 %55
    %vm57 = vcmask 786144
    %58 = vst.msk [vmem:[#allocation0] sm:$0x1] %vm57, %v56
    %s59 = scalar_lea.vmem %s0, 22
    %v60 = vld [vmem:[%s59] sm:$0x1]
    %61 = vrot.lane.b32.xlu0 %v60, 88
    %v62 = vpop.permute.xlu0 %61
    %vm63 = vcmask 753344
    %64 = vst.msk [vmem:[#allocation0] sm:$0x1] %vm63, %v62
    %s65 = scalar_lea.vmem %s0, 21
    %v66 = vld [vmem:[%s65] sm:$0x1]
    %67 = vrot.lane.b32.xlu0 %v66, 84
    %v68 = vpop.permute.xlu0 %67
    %vm69 = vcmask 720544
    %70 = vst.msk [vmem:[#allocation0] sm:$0x1] %vm69, %v68
    %s71 = scalar_lea.vmem %s0, 20
    %v72 = vld [vmem:[%s71] sm:$0x1]
    %73 = vrot.lane.b32.xlu0 %v72, 80
    %v74 = vpop.permute.xlu0 %73
    %vm75 = vcmask 687744
    %76 = vst.msk [vmem:[#allocation0] sm:$0x1] %vm75, %v74
    %s77 = scalar_lea.vmem %s0, 19
    %v78 = vld [vmem:[%s77] sm:$0x1]
    %79 = vrot.lane.b32.xlu0 %v78, 76
    %v80 = vpop.permute.xlu0 %79
    %vm81 = vcmask 654944
    %82 = vst.msk [vmem:[#allocation0] sm:$0x1] %vm81, %v80
    %s83 = scalar_lea.vmem %s0, 18
    %v84 = vld [vmem:[%s83] sm:$0x1]
    %85 = vrot.lane.b32.xlu0 %v84, 72
    %v86 = vpop.permute.xlu0 %85
    %vm87 = vcmask 622144
    %88 = vst.msk [vmem:[#allocation0] sm:$0x1] %vm87, %v86
    %s89 = scalar_lea.vmem %s0, 17
    %v90 = vld [vmem:[%s89] sm:$0x1]
    %91 = vrot.lane.b32.xlu0 %v90, 68
    %v92 = vpop.permute.xlu0 %91
    %vm93 = vcmask 589344
    %94 = vst.msk [vmem:[#allocation0] sm:$0x1] %vm93, %v92
    %s95 = scalar_lea.vmem %s0, 16
    %v96 = vld [vmem:[%s95] sm:$0x1]
    %97 = vrot.lane.b32.xlu0 %v96, 64
    %v98 = vpop.permute.xlu0 %97
    %vm99 = vcmask 556544
    %100 = vst.msk [vmem:[#allocation0] sm:$0x1] %vm99, %v98
    %s101 = scalar_lea.vmem %s0, 15
    %v102 = vld [vmem:[%s101] sm:$0x1]
    %103 = vrot.lane.b32.xlu0 %v102, 60
    %v104 = vpop.permute.xlu0 %103
    %vm105 = vcmask 523744
    %106 = vst.msk [vmem:[#allocation0] sm:$0x1] %vm105, %v104
    %s107 = scalar_lea.vmem %s0, 14
    %v108 = vld [vmem:[%s107] sm:$0x1]
    %109 = vrot.lane.b32.xlu0 %v108, 56
    %v110 = vpop.permute.xlu0 %109
    %vm111 = vcmask 490944
    %112 = vst.msk [vmem:[#allocation0] sm:$0x1] %vm111, %v110
    %s113 = scalar_lea.vmem %s0, 13
    %v114 = vld [vmem:[%s113] sm:$0x1]
    %115 = vrot.lane.b32.xlu0 %v114, 52
    %v116 = vpop.permute.xlu0 %115
    %vm117 = vcmask 458144
    %118 = vst.msk [vmem:[#allocation0] sm:$0x1] %vm117, %v116
    %s119 = scalar_lea.vmem %s0, 12
    %v120 = vld [vmem:[%s119] sm:$0x1]
    %121 = vrot.lane.b32.xlu0 %v120, 48
    %v122 = vpop.permute.xlu0 %121
    %vm123 = vcmask 425344
    %124 = vst.msk [vmem:[#allocation0] sm:$0x1] %vm123, %v122
    %s125 = scalar_lea.vmem %s0, 11
    %v126 = vld [vmem:[%s125] sm:$0x1]
    %127 = vrot.lane.b32.xlu0 %v126, 44
    %v128 = vpop.permute.xlu0 %127
    %vm129 = vcmask 392544
    %130 = vst.msk [vmem:[#allocation0] sm:$0x1] %vm129, %v128
    %s131 = scalar_lea.vmem %s0, 10
    %v132 = vld [vmem:[%s131] sm:$0x1]
    %133 = vrot.lane.b32.xlu0 %v132, 40
    %v134 = vpop.permute.xlu0 %133
    %vm135 = vcmask 359744
    %136 = vst.msk [vmem:[#allocation0] sm:$0x1] %vm135, %v134
    %s137 = scalar_lea.vmem %s0, 9
    %v138 = vld [vmem:[%s137] sm:$0x1]
    %139 = vrot.lane.b32.xlu0 %v138, 36
    %v140 = vpop.permute.xlu0 %139
    %vm141 = vcmask 326944
    %142 = vst.msk [vmem:[#allocation0] sm:$0x1] %vm141, %v140
    %s143 = scalar_lea.vmem %s0, 8
    %v144 = vld [vmem:[%s143] sm:$0x1]
    %145 = vrot.lane.b32.xlu0 %v144, 32
    %v146 = vpop.permute.xlu0 %145
    %vm147 = vcmask 294144
    %148 = vst.msk [vmem:[#allocation0] sm:$0x1] %vm147, %v146
    %s149 = scalar_lea.vmem %s0, 7
    %v150 = vld [vmem:[%s149] sm:$0x1]
    %151 = vrot.lane.b32.xlu0 %v150, 28
    %v152 = vpop.permute.xlu0 %151
    %vm153 = vcmask 261344
    %154 = vst.msk [vmem:[#allocation0] sm:$0x1] %vm153, %v152
    %s155 = scalar_lea.vmem %s0, 6
    %v156 = vld [vmem:[%s155] sm:$0x1]
    %157 = vrot.lane.b32.xlu0 %v156, 24
    %v158 = vpop.permute.xlu0 %157
    %vm159 = vcmask 228544
    %160 = vst.msk [vmem:[#allocation0] sm:$0x1] %vm159, %v158
    %s161 = scalar_lea.vmem %s0, 5
    %v162 = vld [vmem:[%s161] sm:$0x1]
    %163 = vrot.lane.b32.xlu0 %v162, 20
    %v164 = vpop.permute.xlu0 %163
    %vm165 = vcmask 195744
    %166 = vst.msk [vmem:[#allocation0] sm:$0x1] %vm165, %v164
    %s167 = scalar_lea.vmem %s0, 4
    %v168 = vld [vmem:[%s167] sm:$0x1]
    %169 = vrot.lane.b32.xlu0 %v168, 16
    %v170 = vpop.permute.xlu0 %169
    %vm171 = vcmask 162944
    %172 = vst.msk [vmem:[#allocation0] sm:$0x1] %vm171, %v170
    %s173 = scalar_lea.vmem %s0, 3
    %v174 = vld [vmem:[%s173] sm:$0x1]
    %175 = vrot.lane.b32.xlu0 %v174, 12
    %v176 = vpop.permute.xlu0 %175
    %vm177 = vcmask 130144
    %178 = vst.msk [vmem:[#allocation0] sm:$0x1] %vm177, %v176
    %s179 = scalar_lea.vmem %s0, 2
    %v180 = vld [vmem:[%s179] sm:$0x1]
    %181 = vrot.lane.b32.xlu0 %v180, 8
    %v182 = vpop.permute.xlu0 %181
    %vm183 = vcmask 97344
    %184 = vst.msk [vmem:[#allocation0] sm:$0x1] %vm183, %v182
    %s185 = scalar_lea.vmem %s0, 1
    %v186 = vld [vmem:[%s185] sm:$0x1]
    %187 = vrot.lane.b32.xlu0 %v186, 4
    %v188 = vpop.permute.xlu0 %187
    %vm189 = vcmask 64544
    %190 = vst.msk [vmem:[#allocation0] sm:$0x1] %vm189, %v188
    %s192 = sshllo.u32 0, 1
    %v194 = vld [vmem:[#allocation0] sm:%s192]
    %s195 = sshllo.u32 0, 1
    %196 = vst [vmem:[%s1] sm:%s195] %v194

// kernel: decoder_forward.1
$region0: #{decoder_forward.1}
  #allocation0 [shape = 'u32[]', space=smem, size = 0x4, offset = 0x4, fixed_abs, tag = 'smem constant byte address 0x4 - core index']
  #allocation1 [shape = 'u32[144,128]{1,0:T(1,128)}', space=vmem, size = 0x12000, scoped, tag = 'internal scratch']
  %s0 = inlined_call_operand.vmem [shape: bf16[24,128], index: 0, kind: input, shape index: {}]
  %s1 = inlined_call_operand.vmem [shape: bf16[64,384], index: 1, kind: input, shape index: {}]
  %s2 = inlined_call_operand.vmem [shape: bf16[2,64,24], index: 2, kind: input, shape index: {}]
  %s3 = inlined_call_operand.vmem [shape: bf16[2,128,128], index: 3, kind: input, shape index: {}]
  %s4 = inlined_call_operand.vmem [shape: f32[1,128], index: 4, kind: input, shape index: {}]
  %s5 = inlined_call_operand.vmem [shape: bf16[768,128], index: 5, kind: input, shape index: {}]
  %s6 = inlined_call_operand.vmem [shape: bf16[384,128], index: 6, kind: input, shape index: {}]
  %s7 = inlined_call_operand.vmem [shape: f32[1,128], index: 7, kind: input, shape index: {}]
  %s8 = inlined_call_operand.vmem [shape: f32[1,128], index: 8, kind: input, shape index: {}]
  %s9 = inlined_call_operand.vmem [shape: f32[1,128], index: 9, kind: input, shape index: {}]
  %s10 = inlined_call_operand.vmem [shape: f32[1,128], index: 10, kind: input, shape index: {}]
  %s11 = inlined_call_operand.vmem [shape: f32[64,128], index: 11, kind: output, shape index: {}]
  %s12 = sld [smem:[#allocation0]]
  $region54: #{decoder_forward.1} parent=0
    _
  %s14 = ssub.s32 1, %s12
  %s15 = scalar_select 0, %s14, %s12
  // Predicated region
  $region2: #{decoder_forward.1} parent=0 // pred_check
    _
  $region3: #{decoder_forward.1} parent=0 // pred_check_branch
    %17 = sbr.rel (0) target = $region5
  $region4: #{decoder_forward.1} parent=0 // pred_region
    _
  $region5: #{decoder_forward.1} parent=0 // pred_fallthru
    _
  // Predicated region
  $region6: #{decoder_forward.1} parent=0 // pred_check
    _
  $region7: #{decoder_forward.1} parent=0 // pred_check_branch
    %19 = sbr.rel (0) target = $region9
  $region8: #{decoder_forward.1} parent=0 // pred_region
    _
  $region9: #{decoder_forward.1} parent=0 // pred_fallthru
    _
  // Predicated region
  $region10: #{decoder_forward.1} parent=0 // pred_check
    _
  $region11: #{decoder_forward.1} parent=0 // pred_check_branch
    %21 = sbr.rel (0) target = $region13
  $region12: #{decoder_forward.1} parent=0 // pred_region
    _
  $region13: #{decoder_forward.1} parent=0 // pred_fallthru
    _
  // Predicated region
  $region14: #{decoder_forward.1} parent=0 // pred_check
    _
  $region15: #{decoder_forward.1} parent=0 // pred_check_branch
    %23 = sbr.rel (0) target = $region17
  $region16: #{decoder_forward.1} parent=0 // pred_region
    _
  $region17: #{decoder_forward.1} parent=0 // pred_fallthru
    _
  // Predicated region
  $region18: #{decoder_forward.1} parent=0 // pred_check
    _
  $region19: #{decoder_forward.1} parent=0 // pred_check_branch
    %25 = sbr.rel (0) target = $region21
  $region20: #{decoder_forward.1} parent=0 // pred_region
    _
  $region21: #{decoder_forward.1} parent=0 // pred_fallthru
    _
  // Predicated region
  $region22: #{decoder_forward.1} parent=0 // pred_check
    _
  $region23: #{decoder_forward.1} parent=0 // pred_check_branch
    %27 = sbr.rel (0) target = $region25
  $region24: #{decoder_forward.1} parent=0 // pred_region
    _
  $region25: #{decoder_forward.1} parent=0 // pred_fallthru
    _
  // Predicated region
  $region26: #{decoder_forward.1} parent=0 // pred_check
    _
  $region27: #{decoder_forward.1} parent=0 // pred_check_branch
    %29 = sbr.rel (0) target = $region29
  $region28: #{decoder_forward.1} parent=0 // pred_region
    _
  $region29: #{decoder_forward.1} parent=0 // pred_fallthru
    _
  // Predicated region
  $region30: #{decoder_forward.1} parent=0 // pred_check
    _
  $region31: #{decoder_forward.1} parent=0 // pred_check_branch
    %31 = sbr.rel (0) target = $region33
  $region32: #{decoder_forward.1} parent=0 // pred_region
    _
  $region33: #{decoder_forward.1} parent=0 // pred_fallthru
    _
  // Predicated region
  $region34: #{decoder_forward.1} parent=0 // pred_check
    _
  $region35: #{decoder_forward.1} parent=0 // pred_check_branch
    %33 = sbr.rel (0) target = $region37
  $region36: #{decoder_forward.1} parent=0 // pred_region
    _
  $region37: #{decoder_forward.1} parent=0 // pred_fallthru
    _
  // Predicated region
  $region38: #{decoder_forward.1} parent=0 // pred_check
    _
  $region39: #{decoder_forward.1} parent=0 // pred_check_branch
    %35 = sbr.rel (0) target = $region41
  $region40: #{decoder_forward.1} parent=0 // pred_region
    _
  $region41: #{decoder_forward.1} parent=0 // pred_fallthru
    _
  // Predicated region
  $region42: #{decoder_forward.1} parent=0 // pred_check
    _
  $region43: #{decoder_forward.1} parent=0 // pred_check_branch
    %37 = sbr.rel (0) target = $region45
  $region44: #{decoder_forward.1} parent=0 // pred_region
    _
  $region45: #{decoder_forward.1} parent=0 // pred_fallthru
    _
  %v39 = vlaneseq
  %v40 = vshrl.u32 %v39, 7
  %v41 = vadd.s32 %v40, 8
  %v42 = vadd.s32 %v40, 16
  %v43 = vadd.s32 %v40, 24
  %v44 = vadd.s32 %v40, 32
  %v45 = vadd.s32 %v40, 40
  %v46 = vadd.s32 %v40, 48
  %v47 = vadd.s32 %v40, 56
  %vm48 = vcmp.lt.s32.totalorder %v40, 0
  %v49 = vsub.s32 0, %v40
  %v50 = vsel %vm48, %v49, %v40
  %v51 = vshrl.u32 %v50, 5
  %v52 = vand.u32 %v50, 31
  %v53 = vsub.s32 0, %v52
  %v54 = vsel %vm48, %v53, %v52
  %vm55 = vcmp.lt.s32.totalorder %v41, 0
  %v56 = vsub.s32 0, %v41
  %v57 = vsel %vm55, %v56, %v41
  %v58 = vshrl.u32 %v57, 5
  %v59 = vand.u32 %v57, 31
  %v60 = vsub.s32 0, %v59
  %v61 = vsel %vm55, %v60, %v59
  %vm62 = vcmp.lt.s32.totalorder %v42, 0
  %v63 = vsub.s32 0, %v42
  %v64 = vsel %vm62, %v63, %v42
  %v65 = vshrl.u32 %v64, 5
  %v66 = vand.u32 %v64, 31
  %v67 = vsub.s32 0, %v66
  %v68 = vsel %vm62, %v67, %v66
  %vm69 = vcmp.lt.s32.totalorder %v43, 0
  %v70 = vsub.s32 0, %v43
  %v71 = vsel %vm69, %v70, %v43
  %v72 = vshrl.u32 %v71, 5
  %v73 = vand.u32 %v71, 31
  %v74 = vsub.s32 0, %v73
  %v75 = vsel %vm69, %v74, %v73
  %vm76 = vcmp.lt.s32.totalorder %v44, 0
  %v77 = vsub.s32 0, %v44
  %v78 = vsel %vm76, %v77, %v44
  %v79 = vshrl.u32 %v78, 5
  %v80 = vand.u32 %v78, 31
  %v81 = vsub.s32 0, %v80
  %v82 = vsel %vm76, %v81, %v80
  %vm83 = vcmp.lt.s32.totalorder %v45, 0
  %v84 = vsub.s32 0, %v45
  %v85 = vsel %vm83, %v84, %v45
  %v86 = vshrl.u32 %v85, 5
  %v87 = vand.u32 %v85, 31
  %v88 = vsub.s32 0, %v87
  %v89 = vsel %vm83, %v88, %v87
  %vm90 = vcmp.lt.s32.totalorder %v46, 0
  %v91 = vsub.s32 0, %v46
  %v92 = vsel %vm90, %v91, %v46
  %v93 = vshrl.u32 %v92, 5
  %v94 = vand.u32 %v92, 31
  %v95 = vsub.s32 0, %v94
  %v96 = vsel %vm90, %v95, %v94
  %vm97 = vcmp.lt.s32.totalorder %v47, 0
  %v98 = vsub.s32 0, %v47
  %v99 = vsel %vm97, %v98, %v47
  %v100 = vshrl.u32 %v99, 5
  %v101 = vand.u32 %v99, 31
  %v102 = vsub.s32 0, %v101
  %v103 = vsel %vm97, %v102, %v101
  %vm104 = vcmp.ne.s32.totalorder %v54, 0
  %vm105 = vcmp.ne.s32.totalorder %v61, 0
  %vm106 = vcmp.ne.s32.totalorder %v68, 0
  %vm107 = vcmp.ne.s32.totalorder %v75, 0
  %vm108 = vcmp.ne.s32.totalorder %v82, 0
  %vm109 = vcmp.ne.s32.totalorder %v89, 0
  %vm110 = vcmp.ne.s32.totalorder %v96, 0
  %vm111 = vcmp.ne.s32.totalorder %v103, 0
  %vm112 = vcmp.lt.s32.totalorder %v54, 0
  %vm113 = vcmp.lt.s32.totalorder %v61, 0
  %vm114 = vcmp.lt.s32.totalorder %v68, 0
  %vm115 = vcmp.lt.s32.totalorder %v75, 0
  %vm116 = vcmp.lt.s32.totalorder %v82, 0
  %vm117 = vcmp.lt.s32.totalorder %v89, 0
  %vm118 = vcmp.lt.s32.totalorder %v96, 0
  %vm119 = vcmp.lt.s32.totalorder %v103, 0
  %vm120 = vmand %vm112, %vm104
  %vm121 = vmand %vm113, %vm105
  %vm122 = vmand %vm114, %vm106
  %vm123 = vmand %vm115, %vm107
  %vm124 = vmand %vm116, %vm108
  %vm125 = vmand %vm117, %vm109
  %vm126 = vmand %vm118, %vm110
  %vm127 = vmand %vm119, %vm111
  %v128 = vadd.s32 %v54, 32
  %v129 = vadd.s32 %v61, 32
  %v130 = vadd.s32 %v68, 32
  %v131 = vadd.s32 %v75, 32
  %v132 = vadd.s32 %v82, 32
  %v133 = vadd.s32 %v89, 32
  %v134 = vadd.s32 %v96, 32
  %v135 = vadd.s32 %v103, 32
  %v136 = vsel %vm120, %v128, %v54
  %v137 = vsel %vm121, %v129, %v61
  %v138 = vsel %vm122, %v130, %v68
  %v139 = vsel %vm123, %v131, %v75
  %v140 = vsel %vm124, %v132, %v82
  %v141 = vsel %vm125, %v133, %v89
  %v142 = vsel %vm126, %v134, %v96
  %v143 = vsel %vm127, %v135, %v103
  %vm144 = vcmp.ge.s32.totalorder %v136, 1
  %vm145 = vcmp.ge.s32.totalorder %v137, 1
  %vm146 = vcmp.ge.s32.totalorder %v138, 1
  %vm147 = vcmp.ge.s32.totalorder %v139, 1
  %vm148 = vcmp.ge.s32.totalorder %v140, 1
  %vm149 = vcmp.ge.s32.totalorder %v141, 1
  %vm150 = vcmp.ge.s32.totalorder %v142, 1
  %vm151 = vcmp.ge.s32.totalorder %v143, 1
  %v152 = vsel %vm144, 1, 0
  %v153 = vsel %vm145, 1, 0
  %v154 = vsel %vm146, 1, 0
  %v155 = vsel %vm147, 1, 0
  %v156 = vsel %vm148, 1, 0
  %v157 = vsel %vm149, 1, 0
  %v158 = vsel %vm150, 1, 0
  %v159 = vsel %vm151, 1, 0
  %v160 = vcvt.s32.f32 %v152
  %v161 = vcvt.s32.f32 %v153
  %v162 = vcvt.s32.f32 %v154
  %v163 = vcvt.s32.f32 %v155
  %v164 = vcvt.s32.f32 %v156
  %v165 = vcvt.s32.f32 %v157
  %v166 = vcvt.s32.f32 %v158
  %v167 = vcvt.s32.f32 %v159
  %vm168 = vcmp.lt.s32.totalorder %v136, 31
  %vm169 = vcmp.lt.s32.totalorder %v137, 31
  %vm170 = vcmp.lt.s32.totalorder %v138, 31
  %vm171 = vcmp.lt.s32.totalorder %v139, 31
  %vm172 = vcmp.lt.s32.totalorder %v140, 31
  %vm173 = vcmp.lt.s32.totalorder %v141, 31
  %vm174 = vcmp.lt.s32.totalorder %v142, 31
  %vm175 = vcmp.lt.s32.totalorder %v143, 31
  %v176 = vsel %vm168, 1, 0
  %v177 = vsel %vm169, 1, 0
  %v178 = vsel %vm170, 1, 0
  %v179 = vsel %vm171, 1, 0
  %v180 = vsel %vm172, 1, 0
  %v181 = vsel %vm173, 1, 0
  %v182 = vsel %vm174, 1, 0
  %v183 = vsel %vm175, 1, 0
  %v184 = vcvt.s32.f32 %v176
  %v185 = vcvt.s32.f32 %v177
  %v186 = vcvt.s32.f32 %v178
  %v187 = vcvt.s32.f32 %v179
  %v188 = vcvt.s32.f32 %v180
  %v189 = vcvt.s32.f32 %v181
  %v190 = vcvt.s32.f32 %v182
  %v191 = vcvt.s32.f32 %v183
  %v192 = vld [vmem:[%s0] sm:$0xf]
  %v193 = vld [vmem:[%s0 + $0x4] sm:$0xf]
  %v194 = vld [vmem:[%s0 + $0x8] sm:$0xf]
  %v195 = vld [vmem:[%s2] sm:$0xf]
  %v196 = vld [vmem:[%s2 + $0x4] sm:$0xf]
  %v197 = vld [vmem:[%s2 + $0x8] sm:$0xf]
  %v198 = vld [vmem:[%s2 + $0xc] sm:$0xf]
  %v199 = vld [vmem:[%s2 + $0x10] sm:$0xf]
  %v200 = vld [vmem:[%s2 + $0x14] sm:$0xf]
  %v201 = vld [vmem:[%s2 + $0x18] sm:$0xf]
  %v202 = vld [vmem:[%s2 + $0x1c] sm:$0xf]
  %v203 = vld [vmem:[%s3] sm:$0xf]
  %v204 = vld [vmem:[%s3 + $0x4] sm:$0xf]
  %v205 = vld [vmem:[%s3 + $0x8] sm:$0xf]
  %v206 = vld [vmem:[%s3 + $0xc] sm:$0xf]
  %v207 = vld [vmem:[%s3 + $0x10] sm:$0xf]
  %v208 = vld [vmem:[%s3 + $0x14] sm:$0xf]
  %v209 = vld [vmem:[%s3 + $0x18] sm:$0xf]
  %v210 = vld [vmem:[%s3 + $0x1c] sm:$0xf]
  %v211 = vld [vmem:[%s3 + $0x20] sm:$0xf]
  %v212 = vld [vmem:[%s3 + $0x24] sm:$0xf]
  %v213 = vld [vmem:[%s3 + $0x28] sm:$0xf]
  %v214 = vld [vmem:[%s3 + $0x2c] sm:$0xf]
  %v215 = vld [vmem:[%s3 + $0x30] sm:$0xf]
  %v216 = vld [vmem:[%s3 + $0x34] sm:$0xf]
  %v217 = vld [vmem:[%s3 + $0x38] sm:$0xf]
  %v218 = vld [vmem:[%s3 + $0x3c] sm:$0xf]
  %v222 = vunpack.c.l.b16 %v192
  %v223 = vunpack.c.l.b16 %v193
  %v224 = vunpack.c.l.b16 %v194
  %v225 = vpack.c.b16 %v223, %v222
  %v226 = vpack.c.b16 %v224, %v224
  %v245 = vunpack.c.l.b16 %v203
  %v246 = vunpack.c.l.b16 %v204
  %v247 = vunpack.c.l.b16 %v205
  %v248 = vunpack.c.l.b16 %v206
  %v249 = vunpack.c.l.b16 %v207
  %v250 = vunpack.c.l.b16 %v208
  %v251 = vunpack.c.l.b16 %v209
  %v252 = vunpack.c.l.b16 %v210
  %v253 = vunpack.c.l.b16 %v211
  %v254 = vunpack.c.l.b16 %v212
  %v255 = vunpack.c.l.b16 %v213
  %v256 = vunpack.c.l.b16 %v214
  %v257 = vunpack.c.l.b16 %v215
  %v258 = vunpack.c.l.b16 %v216
  %v259 = vunpack.c.l.b16 %v217
  %v260 = vunpack.c.l.b16 %v218
  %v261 = vpack.c.b16 %v246, %v245
  %v262 = vpack.c.b16 %v248, %v247
  %v263 = vpack.c.b16 %v250, %v249
  %v264 = vpack.c.b16 %v252, %v251
  %v265 = vpack.c.b16 %v254, %v253
  %v266 = vpack.c.b16 %v256, %v255
  %v267 = vpack.c.b16 %v258, %v257
  %v268 = vpack.c.b16 %v260, %v259
  %277 = vmatprep.subr.bf16.mxu0 0
  %278 = vmatpush1.bf16.msra.mxu0 %v261
  %279 = vmatprep.subr.bf16.mxu0 0
  %280 = vmatpush1.bf16.msra.mxu0 %v262
  %281 = vmatprep.subr.bf16.mxu0 0
  %282 = vmatpush1.bf16.msra.mxu0 %v263
  %283 = vmatprep.subr.bf16.mxu0 0
  %284 = vmatpush1.bf16.msra.mxu0 %v264
  %285 = vmatprep.subr.bf16.mxu0 0
  %286 = vmatpush1.bf16.msra.mxu0 %v265
  %287 = vmatprep.subr.bf16.mxu0 0
  %288 = vmatpush1.bf16.msra.mxu0 %v266
  %289 = vmatprep.subr.bf16.mxu0 0
  %290 = vmatpush1.bf16.msra.mxu0 %v267
  %291 = vmatprep.subr.bf16.mxu0 0
  %292 = vmatpush1.bf16.msra.mxu0 %v268
  %293 = vmatprep.subr.bf16.mxu0 0
  %294 = vmatpush1.bf16.msra.mxu0 0
  %295 = vmatprep.subr.bf16.mxu0 0
  %296 = vmatpush1.bf16.msra.mxu0 0
  %297 = vmatprep.subr.bf16.mxu0 0
  %298 = vmatpush1.bf16.msra.mxu0 0
  %299 = vmatprep.subr.bf16.mxu0 0
  %300 = vmatpush1.bf16.msra.mxu0 0
  %301 = vmatprep.subr.bf16.mxu0 0
  %302 = vmatpush1.bf16.msra.mxu0 0
  %303 = vmatprep.subr.bf16.mxu0 0
  %304 = vmatpush1.bf16.msra.mxu0 0
  %305 = vmatprep.subr.bf16.mxu0 0
  %306 = vmatpush1.bf16.msra.mxu0 0
  %307 = vmatprep.subr.bf16.mxu0 0
  %308 = vmatpush1.bf16.msra.mxu0 0
  %309 = vmatprep.mubr.bf16.mxu0 0
  %310 = vmatmul.mubr.bf16.gmra.mrb[0].mxu0 %v225
  %v311 = vpop.f32.mrb[0].mxu0
  %v312 = vadd.f32 0.0, %v311
  %v313 = vpop.f32.mrb[0].mxu0
  %v314 = vpop.f32.mrb[0].mxu0
  %v315 = vadd.f32 0.0, %v314
  %v316 = vpop.f32.mrb[0].mxu0
  %317 = vmatprep.mubr.bf16.mxu0 0
  %318 = vmatmul.mubr.bf16.gmra.mrb[0].mxu0 %v226
  %v319 = vpop.f32.mrb[0].mxu0
  %v320 = vadd.f32 0.0, %v319
  %v321 = vpop.f32.mrb[0].mxu0
  %v322 = vpop.f32.mrb[0].mxu0
  %v323 = vpop.f32.mrb[0].mxu0
  %324 = vdwg.mxu0
  %v325 = vpack.c.bf16 %v315, %v312
  %v326 = vpack.c.bf16 %v320, %v320
  %s327 = scalar_lea.vmem %s2, 32
  %v328 = vld [vmem:[%s327] sm:$0xf]
  %v329 = vld [vmem:[%s327 + $0x4] sm:$0xf]
  %v330 = vld [vmem:[%s327 + $0x8] sm:$0xf]
  %v331 = vld [vmem:[%s327 + $0xc] sm:$0xf]
  %v332 = vld [vmem:[%s327 + $0x10] sm:$0xf]
  %v333 = vld [vmem:[%s327 + $0x14] sm:$0xf]
  %v334 = vld [vmem:[%s327 + $0x18] sm:$0xf]
  %v335 = vld [vmem:[%s327 + $0x1c] sm:$0xf]
  %s336 = scalar_lea.vmem %s3, 64
  %v337 = vld [vmem:[%s336] sm:$0xf]
  %v338 = vld [vmem:[%s336 + $0x4] sm:$0xf]
  %v339 = vld [vmem:[%s336 + $0x8] sm:$0xf]
  %v340 = vld [vmem:[%s336 + $0xc] sm:$0xf]
  %v341 = vld [vmem:[%s336 + $0x10] sm:$0xf]
  %v342 = vld [vmem:[%s336 + $0x14] sm:$0xf]
  %v343 = vld [vmem:[%s336 + $0x18] sm:$0xf]
  %v344 = vld [vmem:[%s336 + $0x1c] sm:$0xf]
  %v345 = vld [vmem:[%s336 + $0x20] sm:$0xf]
  %v346 = vld [vmem:[%s336 + $0x24] sm:$0xf]
  %v347 = vld [vmem:[%s336 + $0x28] sm:$0xf]
  %v348 = vld [vmem:[%s336 + $0x2c] sm:$0xf]
  %v349 = vld [vmem:[%s336 + $0x30] sm:$0xf]
  %v350 = vld [vmem:[%s336 + $0x34] sm:$0xf]
  %v351 = vld [vmem:[%s336 + $0x38] sm:$0xf]
  %v352 = vld [vmem:[%s336 + $0x3c] sm:$0xf]
  %v369 = vunpack.c.l.b16 %v337
  %v370 = vunpack.c.l.b16 %v338
  %v371 = vunpack.c.l.b16 %v339
  %v372 = vunpack.c.l.b16 %v340
  %v373 = vunpack.c.l.b16 %v341
  %v374 = vunpack.c.l.b16 %v342
  %v375 = vunpack.c.l.b16 %v343
  %v376 = vunpack.c.l.b16 %v344
  %v377 = vunpack.c.l.b16 %v345
  %v378 = vunpack.c.l.b16 %v346
  %v379 = vunpack.c.l.b16 %v347
  %v380 = vunpack.c.l.b16 %v348
  %v381 = vunpack.c.l.b16 %v349
  %v382 = vunpack.c.l.b16 %v350
  %v383 = vunpack.c.l.b16 %v351
  %v384 = vunpack.c.l.b16 %v352
  %v385 = vpack.c.b16 %v370, %v369
  %v386 = vpack.c.b16 %v372, %v371
  %v387 = vpack.c.b16 %v374, %v373
  %v388 = vpack.c.b16 %v376, %v375
  %v389 = vpack.c.b16 %v378, %v377
  %v390 = vpack.c.b16 %v380, %v379
  %v391 = vpack.c.b16 %v382, %v381
  %v392 = vpack.c.b16 %v384, %v383
  %401 = vmatprep.subr.bf16.mxu0 0
  %402 = vmatpush1.bf16.msra.mxu0 %v385
  %403 = vmatprep.subr.bf16.mxu0 0
  %404 = vmatpush1.bf16.msra.mxu0 %v386
  %405 = vmatprep.subr.bf16.mxu0 0
  %406 = vmatpush1.bf16.msra.mxu0 %v387
  %407 = vmatprep.subr.bf16.mxu0 0
  %408 = vmatpush1.bf16.msra.mxu0 %v388
  %409 = vmatprep.subr.bf16.mxu0 0
  %410 = vmatpush1.bf16.msra.mxu0 %v389
  %411 = vmatprep.subr.bf16.mxu0 0
  %412 = vmatpush1.bf16.msra.mxu0 %v390
  %413 = vmatprep.subr.bf16.mxu0 0
  %414 = vmatpush1.bf16.msra.mxu0 %v391
  %415 = vmatprep.subr.bf16.mxu0 0
  %416 = vmatpush1.bf16.msra.mxu0 %v392
  %417 = vmatprep.subr.bf16.mxu0 0
  %418 = vmatpush1.bf16.msra.mxu0 0
  %419 = vmatprep.subr.bf16.mxu0 0
  %420 = vmatpush1.bf16.msra.mxu0 0
  %421 = vmatprep.subr.bf16.mxu0 0
  %422 = vmatpush1.bf16.msra.mxu0 0
  %423 = vmatprep.subr.bf16.mxu0 0
  %424 = vmatpush1.bf16.msra.mxu0 0
  %425 = vmatprep.subr.bf16.mxu0 0
  %426 = vmatpush1.bf16.msra.mxu0 0
  %427 = vmatprep.subr.bf16.mxu0 0
  %428 = vmatpush1.bf16.msra.mxu0 0
  %429 = vmatprep.subr.bf16.mxu0 0
  %430 = vmatpush1.bf16.msra.mxu0 0
  %431 = vmatprep.subr.bf16.mxu0 0
  %432 = vmatpush1.bf16.msra.mxu0 0
  %433 = vmatprep.mubr.bf16.mxu0 0
  %434 = vmatmul.mubr.bf16.gmra.mrb[0].mxu0 %v225
  %v435 = vpop.f32.mrb[0].mxu0
  %v436 = vadd.f32 0.0, %v435
  %v437 = vpop.f32.mrb[0].mxu0
  %v438 = vpop.f32.mrb[0].mxu0
  %v439 = vadd.f32 0.0, %v438
  %v440 = vpop.f32.mrb[0].mxu0
  %441 = vmatprep.mubr.bf16.mxu0 0
  %442 = vmatmul.mubr.bf16.gmra.mrb[0].mxu0 %v226
  %v443 = vpop.f32.mrb[0].mxu0
  %v444 = vadd.f32 0.0, %v443
  %v445 = vpop.f32.mrb[0].mxu0
  %v446 = vpop.f32.mrb[0].mxu0
  %v447 = vpop.f32.mrb[0].mxu0
  %448 = vdwg.mxu0
  %v449 = vpack.c.bf16 %v439, %v436
  %v450 = vpack.c.bf16 %v444, %v444
  %v459 = vunpack.c.l.b16 %v328
  %v460 = vunpack.c.l.b16 %v329
  %v461 = vunpack.c.l.b16 %v330
  %v462 = vunpack.c.l.b16 %v331
  %v463 = vunpack.c.l.b16 %v332
  %v464 = vunpack.c.l.b16 %v333
  %v465 = vunpack.c.l.b16 %v334
  %v466 = vunpack.c.l.b16 %v335
  %v467 = vpack.c.b16 %v460, %v459
  %v468 = vpack.c.b16 %v462, %v461
  %v469 = vpack.c.b16 %v464, %v463
  %v470 = vpack.c.b16 %v466, %v465
  %vm471 = vcmask 195584
  %v473 = vsel %vm471, %v467, 0
  %v476 = vsel %vm471, %v468, 0
  %v479 = vsel %vm471, %v469, 0
  %v482 = vsel %vm471, %v470, 0
  %vm484 = vcmask 1043456
  %v486 = vsel %vm484, %v450, 0
  %488 = vmatprep.subr.bf16.mxu0 0
  %489 = vmatpush1.bf16.msra.mxu0 %v449
  %490 = vmatprep.subr.bf16.mxu0 0
  %491 = vmatpush1.bf16.msra.mxu0 %v486
  %492 = vmatprep.subr.bf16.mxu0 0
  %493 = vmatpush1.bf16.msra.mxu0 0
  %494 = vmatprep.subr.bf16.mxu0 0
  %495 = vmatpush1.bf16.msra.mxu0 0
  %496 = vmatprep.subr.bf16.mxu0 0
  %497 = vmatpush1.bf16.msra.mxu0 0
  %498 = vmatprep.subr.bf16.mxu0 0
  %499 = vmatpush1.bf16.msra.mxu0 0
  %500 = vmatprep.subr.bf16.mxu0 0
  %501 = vmatpush1.bf16.msra.mxu0 0
  %502 = vmatprep.subr.bf16.mxu0 0
  %503 = vmatpush1.bf16.msra.mxu0 0
  %504 = vmatprep.subr.bf16.mxu0 0
  %505 = vmatpush1.bf16.msra.mxu0 0
  %506 = vmatprep.subr.bf16.mxu0 0
  %507 = vmatpush1.bf16.msra.mxu0 0
  %508 = vmatprep.subr.bf16.mxu0 0
  %509 = vmatpush1.bf16.msra.mxu0 0
  %510 = vmatprep.subr.bf16.mxu0 0
  %511 = vmatpush1.bf16.msra.mxu0 0
  %512 = vmatprep.subr.bf16.mxu0 0
  %513 = vmatpush1.bf16.msra.mxu0 0
  %514 = vmatprep.subr.bf16.mxu0 0
  %515 = vmatpush1.bf16.msra.mxu0 0
  %516 = vmatprep.subr.bf16.mxu0 0
  %517 = vmatpush1.bf16.msra.mxu0 0
  %518 = vmatprep.subr.bf16.mxu0 0
  %519 = vmatpush1.bf16.msra.mxu0 0
  %520 = vmatprep.mubr.bf16.mxu0 0
  %521 = vmatmul.mubr.bf16.gmra.mrb[0].mxu0 %v473
  %v522 = vpop.f32.mrb[0].mxu0
  %v523 = vadd.f32 0.0, %v522
  %v524 = vpop.f32.mrb[0].mxu0
  %v525 = vpop.f32.mrb[0].mxu0
  %v526 = vadd.f32 0.0, %v525
  %v527 = vpop.f32.mrb[0].mxu0
  %528 = vmatprep.mubr.bf16.mxu0 0
  %529 = vmatmul.mubr.bf16.gmra.mrb[0].mxu0 %v476
  %v530 = vpop.f32.mrb[0].mxu0
  %v531 = vadd.f32 0.0, %v530
  %v532 = vpop.f32.mrb[0].mxu0
  %v533 = vpop.f32.mrb[0].mxu0
  %v534 = vadd.f32 0.0, %v533
  %v535 = vpop.f32.mrb[0].mxu0
  %536 = vmatprep.mubr.bf16.mxu0 0
  %537 = vmatmul.mubr.bf16.gmra.mrb[0].mxu0 %v479
  %v538 = vpop.f32.mrb[0].mxu0
  %v539 = vadd.f32 0.0, %v538
  %v540 = vpop.f32.mrb[0].mxu0
  %v541 = vpop.f32.mrb[0].mxu0
  %v542 = vadd.f32 0.0, %v541
  %v543 = vpop.f32.mrb[0].mxu0
  %544 = vmatprep.mubr.bf16.mxu0 0
  %545 = vmatmul.mubr.bf16.gmra.mrb[0].mxu0 %v482
  %v546 = vpop.f32.mrb[0].mxu0
  %v547 = vadd.f32 0.0, %v546
  %v548 = vpop.f32.mrb[0].mxu0
  %v549 = vpop.f32.mrb[0].mxu0
  %v550 = vadd.f32 0.0, %v549
  %v551 = vpop.f32.mrb[0].mxu0
  %552 = vdwg.mxu0
  %v561 = vunpack.c.l.b16 %v195
  %v562 = vunpack.c.l.b16 %v196
  %v563 = vunpack.c.l.b16 %v197
  %v564 = vunpack.c.l.b16 %v198
  %v565 = vunpack.c.l.b16 %v199
  %v566 = vunpack.c.l.b16 %v200
  %v567 = vunpack.c.l.b16 %v201
  %v568 = vunpack.c.l.b16 %v202
  %v569 = vpack.c.b16 %v562, %v561
  %v570 = vpack.c.b16 %v564, %v563
  %v571 = vpack.c.b16 %v566, %v565
  %v572 = vpack.c.b16 %v568, %v567
  %v574 = vsel %vm471, %v569, 0
  %v577 = vsel %vm471, %v570, 0
  %v580 = vsel %vm471, %v571, 0
  %v583 = vsel %vm471, %v572, 0
  %v586 = vsel %vm484, %v326, 0
  %588 = vmatprep.subr.bf16.mxu0 0
  %589 = vmatpush1.bf16.msra.mxu0 %v325
  %590 = vmatprep.subr.bf16.mxu0 0
  %591 = vmatpush1.bf16.msra.mxu0 %v586
  %592 = vmatprep.subr.bf16.mxu0 0
  %593 = vmatpush1.bf16.msra.mxu0 0
  %594 = vmatprep.subr.bf16.mxu0 0
  %595 = vmatpush1.bf16.msra.mxu0 0
  %596 = vmatprep.subr.bf16.mxu0 0
  %597 = vmatpush1.bf16.msra.mxu0 0
  %598 = vmatprep.subr.bf16.mxu0 0
  %599 = vmatpush1.bf16.msra.mxu0 0
  %600 = vmatprep.subr.bf16.mxu0 0
  %601 = vmatpush1.bf16.msra.mxu0 0
  %602 = vmatprep.subr.bf16.mxu0 0
  %603 = vmatpush1.bf16.msra.mxu0 0
  %604 = vmatprep.subr.bf16.mxu0 0
  %605 = vmatpush1.bf16.msra.mxu0 0
  %606 = vmatprep.subr.bf16.mxu0 0
  %607 = vmatpush1.bf16.msra.mxu0 0
  %608 = vmatprep.subr.bf16.mxu0 0
  %609 = vmatpush1.bf16.msra.mxu0 0
  %610 = vmatprep.subr.bf16.mxu0 0
  %611 = vmatpush1.bf16.msra.mxu0 0
  %612 = vmatprep.subr.bf16.mxu0 0
  %613 = vmatpush1.bf16.msra.mxu0 0
  %614 = vmatprep.subr.bf16.mxu0 0
  %615 = vmatpush1.bf16.msra.mxu0 0
  %616 = vmatprep.subr.bf16.mxu0 0
  %617 = vmatpush1.bf16.msra.mxu0 0
  %618 = vmatprep.subr.bf16.mxu0 0
  %619 = vmatpush1.bf16.msra.mxu0 0
  %620 = vmatprep.mubr.bf16.mxu0 0
  %621 = vmatmul.mubr.bf16.gmra.mrb[0].mxu0 %v574
  %v622 = vpop.f32.mrb[0].mxu0
  %v623 = vadd.f32 %v523, %v622
  %v624 = vpop.f32.mrb[0].mxu0
  %v625 = vpop.f32.mrb[0].mxu0
  %v626 = vadd.f32 %v526, %v625
  %v627 = vpop.f32.mrb[0].mxu0
  %628 = vmatprep.mubr.bf16.mxu0 0
  %629 = vmatmul.mubr.bf16.gmra.mrb[0].mxu0 %v577
  %v630 = vpop.f32.mrb[0].mxu0
  %v631 = vadd.f32 %v531, %v630
  %v632 = vpop.f32.mrb[0].mxu0
  %v633 = vpop.f32.mrb[0].mxu0
  %v634 = vadd.f32 %v534, %v633
  %v635 = vpop.f32.mrb[0].mxu0
  %636 = vmatprep.mubr.bf16.mxu0 0
  %637 = vmatmul.mubr.bf16.gmra.mrb[0].mxu0 %v580
  %v638 = vpop.f32.mrb[0].mxu0
  %v639 = vadd.f32 %v539, %v638
  %v640 = vpop.f32.mrb[0].mxu0
  %v641 = vpop.f32.mrb[0].mxu0
  %v642 = vadd.f32 %v542, %v641
  %v643 = vpop.f32.mrb[0].mxu0
  %644 = vmatprep.mubr.bf16.mxu0 0
  %645 = vmatmul.mubr.bf16.gmra.mrb[0].mxu0 %v583
  %v646 = vpop.f32.mrb[0].mxu0
  %v647 = vadd.f32 %v547, %v646
  %v648 = vpop.f32.mrb[0].mxu0
  %v649 = vpop.f32.mrb[0].mxu0
  %v650 = vadd.f32 %v550, %v649
  %v651 = vpop.f32.mrb[0].mxu0
  %652 = vdwg.mxu0
  %v653 = vld [vmem:[%s4] sm:$0x1]
  %v655 = vlaneseq
  %v656 = vshrl.u32 %v655, 7
  %v657 = vsub.s32 0, %v656
  %v658 = vrot.slane %v653, %v657
  %v660 = vadd.f32 %v623, %v658
  %v661 = vadd.f32 %v626, %v658
  %v662 = vadd.f32 %v631, %v658
  %v663 = vadd.f32 %v634, %v658
  %v664 = vadd.f32 %v639, %v658
  %v665 = vadd.f32 %v642, %v658
  %v666 = vadd.f32 %v647, %v658
  %v667 = vadd.f32 %v650, %v658
  %v668 = vrot.slane %v660, 7
  %v669 = vrot.slane %v661, 7
  %v670 = vrot.slane %v662, 7
  %v671 = vrot.slane %v663, 7
  %v672 = vrot.slane %v664, 7
  %v673 = vrot.slane %v665, 7
  %v674 = vrot.slane %v666, 7
  %v675 = vrot.slane %v667, 7
  %vm676 = vcmp.lt.s32.totalorder %v40, 1
  %v677 = vsel %vm676, %v674, %v675
  %v678 = vsel %vm676, %v673, %v674
  %v679 = vsel %vm676, %v672, %v673
  %v680 = vsel %vm676, %v671, %v672
  %v681 = vsel %vm676, %v670, %v671
  %v682 = vsel %vm676, %v669, %v670
  %v683 = vsel %vm676, %v668, %v669
  %v684 = vsel %vm676, %v675, %v668
  %v685 = vmul.f32 %v684, %v160
  %v686 = vmul.f32 %v683, %v161
  %v687 = vmul.f32 %v682, %v162
  %v688 = vmul.f32 %v681, %v163
  %v689 = vmul.f32 %v680, %v164
  %v690 = vmul.f32 %v679, %v165
  %v691 = vmul.f32 %v678, %v166
  %v692 = vmul.f32 %v677, %v167
  %v693 = vpack.c.bf16 %v686, %v685
  %v694 = vpack.c.bf16 %v688, %v687
  %v695 = vpack.c.bf16 %v690, %v689
  %v696 = vpack.c.bf16 %v692, %v691
  %v697 = vpack.c.bf16 %v661, %v660
  %v698 = vpack.c.bf16 %v663, %v662
  %v699 = vpack.c.bf16 %v665, %v664
  %v700 = vpack.c.bf16 %v667, %v666
  %v701 = vrot.slane %v660, 1
  %v702 = vrot.slane %v661, 1
  %v703 = vrot.slane %v662, 1
  %v704 = vrot.slane %v663, 1
  %v705 = vrot.slane %v664, 1
  %v706 = vrot.slane %v665, 1
  %v707 = vrot.slane %v666, 1
  %v708 = vrot.slane %v667, 1
  %vm709 = vcmp.lt.s32.totalorder %v40, 7
  %v710 = vsel %vm709, %v707, %v708
  %v711 = vsel %vm709, %v706, %v707
  %v712 = vsel %vm709, %v705, %v706
  %v713 = vsel %vm709, %v704, %v705
  %v714 = vsel %vm709, %v703, %v704
  %v715 = vsel %vm709, %v702, %v703
  %v716 = vsel %vm709, %v701, %v702
  %v717 = vsel %vm709, %v708, %v701
  %v718 = vmul.f32 %v716, %v184
  %v719 = vmul.f32 %v715, %v185
  %v720 = vmul.f32 %v714, %v186
  %v721 = vmul.f32 %v713, %v187
  %v722 = vmul.f32 %v712, %v188
  %v723 = vmul.f32 %v711, %v189
  %v724 = vmul.f32 %v710, %v190
  %v725 = vmul.f32 %v717, %v191
  %v726 = vpack.c.bf16 %v719, %v718
  %v727 = vpack.c.bf16 %v721, %v720
  %v728 = vpack.c.bf16 %v723, %v722
  %v729 = vpack.c.bf16 %v725, %v724
  %v730 = vld [vmem:[%s1] sm:$0xff]
  %v731 = vld [vmem:[%s1 + $0x8] sm:$0xf]
  %v732 = vld [vmem:[%s1 + $0xc] sm:$0xff]
  %v733 = vld [vmem:[%s1 + $0x14] sm:$0xf]
  %v734 = vld [vmem:[%s1 + $0x18] sm:$0xff]
  %v735 = vld [vmem:[%s1 + $0x20] sm:$0xf]
  %v736 = vld [vmem:[%s1 + $0x24] sm:$0xff]
  %v737 = vld [vmem:[%s1 + $0x2c] sm:$0xf]
  %v738 = vld [vmem:[%s1 + $0x30] sm:$0xff]
  %v739 = vld [vmem:[%s1 + $0x38] sm:$0xf]
  %v740 = vld [vmem:[%s1 + $0x3c] sm:$0xff]
  %v741 = vld [vmem:[%s1 + $0x44] sm:$0xf]
  %v742 = vld [vmem:[%s1 + $0x48] sm:$0xff]
  %v743 = vld [vmem:[%s1 + $0x50] sm:$0xf]
  %v744 = vld [vmem:[%s1 + $0x54] sm:$0xff]
  %v745 = vld [vmem:[%s1 + $0x5c] sm:$0xf]
  %v762 = vunpack.c.l.b16 %v730
  %v763 = vunpack.c.h.b16 %v730
  %v764 = vunpack.c.l.b16 %v731
  %v765 = vunpack.c.l.b16 %v732
  %v766 = vunpack.c.h.b16 %v732
  %v767 = vunpack.c.l.b16 %v733
  %v768 = vunpack.c.l.b16 %v734
  %v769 = vunpack.c.h.b16 %v734
  %v770 = vunpack.c.l.b16 %v735
  %v771 = vunpack.c.l.b16 %v736
  %v772 = vunpack.c.h.b16 %v736
  %v773 = vunpack.c.l.b16 %v737
  %v774 = vunpack.c.l.b16 %v738
  %v775 = vunpack.c.h.b16 %v738
  %v776 = vunpack.c.l.b16 %v739
  %v777 = vunpack.c.l.b16 %v740
  %v778 = vunpack.c.h.b16 %v740
  %v779 = vunpack.c.l.b16 %v741
  %v780 = vunpack.c.l.b16 %v742
  %v781 = vunpack.c.h.b16 %v742
  %v782 = vunpack.c.l.b16 %v743
  %v783 = vunpack.c.l.b16 %v744
  %v784 = vunpack.c.h.b16 %v744
  %v785 = vunpack.c.l.b16 %v745
  %v786 = vpack.c.b16 %v765, %v762
  %v787 = vpack.c.b16 %v766, %v763
  %v788 = vpack.c.b16 %v767, %v764
  %v789 = vpack.c.b16 %v771, %v768
  %v790 = vpack.c.b16 %v772, %v769
  %v791 = vpack.c.b16 %v773, %v770
  %v792 = vpack.c.b16 %v777, %v774
  %v793 = vpack.c.b16 %v778, %v775
  %v794 = vpack.c.b16 %v779, %v776
  %v795 = vpack.c.b16 %v783, %v780
  %v796 = vpack.c.b16 %v784, %v781
  %v797 = vpack.c.b16 %v785, %v782
  %v810 = vld [vmem:[%s5] sm:$0xf]
  %v811 = vld [vmem:[%s5 + $0x4] sm:$0xf]
  %v812 = vld [vmem:[%s5 + $0x8] sm:$0xf]
  %v813 = vld [vmem:[%s5 + $0xc] sm:$0xf]
  %v814 = vld [vmem:[%s5 + $0x10] sm:$0xf]
  %v815 = vld [vmem:[%s5 + $0x14] sm:$0xf]
  %v816 = vld [vmem:[%s5 + $0x18] sm:$0xf]
  %v817 = vld [vmem:[%s5 + $0x1c] sm:$0xf]
  %v818 = vld [vmem:[%s5 + $0x20] sm:$0xf]
  %v819 = vld [vmem:[%s5 + $0x24] sm:$0xf]
  %v820 = vld [vmem:[%s5 + $0x28] sm:$0xf]
  %v821 = vld [vmem:[%s5 + $0x2c] sm:$0xf]
  %v822 = vld [vmem:[%s5 + $0x30] sm:$0xf]
  %v823 = vld [vmem:[%s5 + $0x34] sm:$0xf]
  %v824 = vld [vmem:[%s5 + $0x38] sm:$0xf]
  %v825 = vld [vmem:[%s5 + $0x3c] sm:$0xf]
  %v826 = vld [vmem:[%s5 + $0x40] sm:$0xf]
  %v827 = vld [vmem:[%s5 + $0x44] sm:$0xf]
  %v828 = vld [vmem:[%s5 + $0x48] sm:$0xf]
  %v829 = vld [vmem:[%s5 + $0x4c] sm:$0xf]
  %v830 = vld [vmem:[%s5 + $0x50] sm:$0xf]
  %v831 = vld [vmem:[%s5 + $0x54] sm:$0xf]
  %v832 = vld [vmem:[%s5 + $0x58] sm:$0xf]
  %v833 = vld [vmem:[%s5 + $0x5c] sm:$0xf]
  %v834 = vld [vmem:[%s5 + $0x60] sm:$0xf]
  %v835 = vld [vmem:[%s5 + $0x64] sm:$0xf]
  %v836 = vld [vmem:[%s5 + $0x68] sm:$0xf]
  %v837 = vld [vmem:[%s5 + $0x6c] sm:$0xf]
  %v838 = vld [vmem:[%s5 + $0x70] sm:$0xf]
  %v839 = vld [vmem:[%s5 + $0x74] sm:$0xf]
  %v840 = vld [vmem:[%s5 + $0x78] sm:$0xf]
  %v841 = vld [vmem:[%s5 + $0x7c] sm:$0xf]
  %v842 = vld [vmem:[%s5 + $0x80] sm:$0xf]
  %v843 = vld [vmem:[%s5 + $0x84] sm:$0xf]
  %v844 = vld [vmem:[%s5 + $0x88] sm:$0xf]
  %v845 = vld [vmem:[%s5 + $0x8c] sm:$0xf]
  %v846 = vld [vmem:[%s5 + $0x90] sm:$0xf]
  %v847 = vld [vmem:[%s5 + $0x94] sm:$0xf]
  %v848 = vld [vmem:[%s5 + $0x98] sm:$0xf]
  %v849 = vld [vmem:[%s5 + $0x9c] sm:$0xf]
  %v850 = vld [vmem:[%s5 + $0xa0] sm:$0xf]
  %v851 = vld [vmem:[%s5 + $0xa4] sm:$0xf]
  %v852 = vld [vmem:[%s5 + $0xa8] sm:$0xf]
  %v853 = vld [vmem:[%s5 + $0xac] sm:$0xf]
  %v854 = vld [vmem:[%s5 + $0xb0] sm:$0xf]
  %v855 = vld [vmem:[%s5 + $0xb4] sm:$0xf]
  %v856 = vld [vmem:[%s5 + $0xb8] sm:$0xf]
  %v857 = vld [vmem:[%s5 + $0xbc] sm:$0xf]
  %v858 = vld [vmem:[%s5 + $0xc0] sm:$0xf]
  %v859 = vld [vmem:[%s5 + $0xc4] sm:$0xf]
  %v860 = vld [vmem:[%s5 + $0xc8] sm:$0xf]
  %v861 = vld [vmem:[%s5 + $0xcc] sm:$0xf]
  %v862 = vld [vmem:[%s5 + $0xd0] sm:$0xf]
  %v863 = vld [vmem:[%s5 + $0xd4] sm:$0xf]
  %v864 = vld [vmem:[%s5 + $0xd8] sm:$0xf]
  %v865 = vld [vmem:[%s5 + $0xdc] sm:$0xf]
  %v866 = vld [vmem:[%s5 + $0xe0] sm:$0xf]
  %v867 = vld [vmem:[%s5 + $0xe4] sm:$0xf]
  %v868 = vld [vmem:[%s5 + $0xe8] sm:$0xf]
  %v869 = vld [vmem:[%s5 + $0xec] sm:$0xf]
  %v870 = vld [vmem:[%s5 + $0xf0] sm:$0xf]
  %v871 = vld [vmem:[%s5 + $0xf4] sm:$0xf]
  %v872 = vld [vmem:[%s5 + $0xf8] sm:$0xf]
  %v873 = vld [vmem:[%s5 + $0xfc] sm:$0xf]
  %v874 = vld [vmem:[%s5 + $0x100] sm:$0xf]
  %v875 = vld [vmem:[%s5 + $0x104] sm:$0xf]
  %v876 = vld [vmem:[%s5 + $0x108] sm:$0xf]
  %v877 = vld [vmem:[%s5 + $0x10c] sm:$0xf]
  %v878 = vld [vmem:[%s5 + $0x110] sm:$0xf]
  %v879 = vld [vmem:[%s5 + $0x114] sm:$0xf]
  %v880 = vld [vmem:[%s5 + $0x118] sm:$0xf]
  %v881 = vld [vmem:[%s5 + $0x11c] sm:$0xf]
  %v882 = vld [vmem:[%s5 + $0x120] sm:$0xf]
  %v883 = vld [vmem:[%s5 + $0x124] sm:$0xf]
  %v884 = vld [vmem:[%s5 + $0x128] sm:$0xf]
  %v885 = vld [vmem:[%s5 + $0x12c] sm:$0xf]
  %v886 = vld [vmem:[%s5 + $0x130] sm:$0xf]
  %v887 = vld [vmem:[%s5 + $0x134] sm:$0xf]
  %v888 = vld [vmem:[%s5 + $0x138] sm:$0xf]
  %v889 = vld [vmem:[%s5 + $0x13c] sm:$0xf]
  %v890 = vld [vmem:[%s5 + $0x140] sm:$0xf]
  %v891 = vld [vmem:[%s5 + $0x144] sm:$0xf]
  %v892 = vld [vmem:[%s5 + $0x148] sm:$0xf]
  %v893 = vld [vmem:[%s5 + $0x14c] sm:$0xf]
  %v894 = vld [vmem:[%s5 + $0x150] sm:$0xf]
  %v895 = vld [vmem:[%s5 + $0x154] sm:$0xf]
  %v896 = vld [vmem:[%s5 + $0x158] sm:$0xf]
  %v897 = vld [vmem:[%s5 + $0x15c] sm:$0xf]
  %v898 = vld [vmem:[%s5 + $0x160] sm:$0xf]
  %v899 = vld [vmem:[%s5 + $0x164] sm:$0xf]
  %v900 = vld [vmem:[%s5 + $0x168] sm:$0xf]
  %v901 = vld [vmem:[%s5 + $0x16c] sm:$0xf]
  %v902 = vld [vmem:[%s5 + $0x170] sm:$0xf]
  %v903 = vld [vmem:[%s5 + $0x174] sm:$0xf]
  %v904 = vld [vmem:[%s5 + $0x178] sm:$0xf]
  %v905 = vld [vmem:[%s5 + $0x17c] sm:$0xf]
  %v1002 = vunpack.c.l.b16 %v810
  %v1003 = vunpack.c.l.b16 %v811
  %v1004 = vunpack.c.l.b16 %v812
  %v1005 = vunpack.c.l.b16 %v813
  %v1006 = vunpack.c.l.b16 %v814
  %v1007 = vunpack.c.l.b16 %v815
  %v1008 = vunpack.c.l.b16 %v816
  %v1009 = vunpack.c.l.b16 %v817
  %v1010 = vunpack.c.l.b16 %v818
  %v1011 = vunpack.c.l.b16 %v819
  %v1012 = vunpack.c.l.b16 %v820
  %v1013 = vunpack.c.l.b16 %v821
  %v1014 = vunpack.c.l.b16 %v822
  %v1015 = vunpack.c.l.b16 %v823
  %v1016 = vunpack.c.l.b16 %v824
  %v1017 = vunpack.c.l.b16 %v825
  %v1018 = vunpack.c.l.b16 %v826
  %v1019 = vunpack.c.l.b16 %v827
  %v1020 = vunpack.c.l.b16 %v828
  %v1021 = vunpack.c.l.b16 %v829
  %v1022 = vunpack.c.l.b16 %v830
  %v1023 = vunpack.c.l.b16 %v831
  %v1024 = vunpack.c.l.b16 %v832
  %v1025 = vunpack.c.l.b16 %v833
  %v1026 = vunpack.c.l.b16 %v834
  %v1027 = vunpack.c.l.b16 %v835
  %v1028 = vunpack.c.l.b16 %v836
  %v1029 = vunpack.c.l.b16 %v837
  %v1030 = vunpack.c.l.b16 %v838
  %v1031 = vunpack.c.l.b16 %v839
  %v1032 = vunpack.c.l.b16 %v840
  %v1033 = vunpack.c.l.b16 %v841
  %v1034 = vunpack.c.l.b16 %v842
  %v1035 = vunpack.c.l.b16 %v843
  %v1036 = vunpack.c.l.b16 %v844
  %v1037 = vunpack.c.l.b16 %v845
  %v1038 = vunpack.c.l.b16 %v846
  %v1039 = vunpack.c.l.b16 %v847
  %v1040 = vunpack.c.l.b16 %v848
  %v1041 = vunpack.c.l.b16 %v849
  %v1042 = vunpack.c.l.b16 %v850
  %v1043 = vunpack.c.l.b16 %v851
  %v1044 = vunpack.c.l.b16 %v852
  %v1045 = vunpack.c.l.b16 %v853
  %v1046 = vunpack.c.l.b16 %v854
  %v1047 = vunpack.c.l.b16 %v855
  %v1048 = vunpack.c.l.b16 %v856
  %v1049 = vunpack.c.l.b16 %v857
  %v1050 = vunpack.c.l.b16 %v858
  %v1051 = vunpack.c.l.b16 %v859
  %v1052 = vunpack.c.l.b16 %v860
  %v1053 = vunpack.c.l.b16 %v861
  %v1054 = vunpack.c.l.b16 %v862
  %v1055 = vunpack.c.l.b16 %v863
  %v1056 = vunpack.c.l.b16 %v864
  %v1057 = vunpack.c.l.b16 %v865
  %v1058 = vunpack.c.l.b16 %v866
  %v1059 = vunpack.c.l.b16 %v867
  %v1060 = vunpack.c.l.b16 %v868
  %v1061 = vunpack.c.l.b16 %v869
  %v1062 = vunpack.c.l.b16 %v870
  %v1063 = vunpack.c.l.b16 %v871
  %v1064 = vunpack.c.l.b16 %v872
  %v1065 = vunpack.c.l.b16 %v873
  %v1066 = vunpack.c.l.b16 %v874
  %v1067 = vunpack.c.l.b16 %v875
  %v1068 = vunpack.c.l.b16 %v876
  %v1069 = vunpack.c.l.b16 %v877
  %v1070 = vunpack.c.l.b16 %v878
  %v1071 = vunpack.c.l.b16 %v879
  %v1072 = vunpack.c.l.b16 %v880
  %v1073 = vunpack.c.l.b16 %v881
  %v1074 = vunpack.c.l.b16 %v882
  %v1075 = vunpack.c.l.b16 %v883
  %v1076 = vunpack.c.l.b16 %v884
  %v1077 = vunpack.c.l.b16 %v885
  %v1078 = vunpack.c.l.b16 %v886
  %v1079 = vunpack.c.l.b16 %v887
  %v1080 = vunpack.c.l.b16 %v888
  %v1081 = vunpack.c.l.b16 %v889
  %v1082 = vunpack.c.l.b16 %v890
  %v1083 = vunpack.c.l.b16 %v891
  %v1084 = vunpack.c.l.b16 %v892
  %v1085 = vunpack.c.l.b16 %v893
  %v1086 = vunpack.c.l.b16 %v894
  %v1087 = vunpack.c.l.b16 %v895
  %v1088 = vunpack.c.l.b16 %v896
  %v1089 = vunpack.c.l.b16 %v897
  %v1090 = vunpack.c.l.b16 %v898
  %v1091 = vunpack.c.l.b16 %v899
  %v1092 = vunpack.c.l.b16 %v900
  %v1093 = vunpack.c.l.b16 %v901
  %v1094 = vunpack.c.l.b16 %v902
  %v1095 = vunpack.c.l.b16 %v903
  %v1096 = vunpack.c.l.b16 %v904
  %v1097 = vunpack.c.l.b16 %v905
  %v1098 = vpack.c.b16 %v1003, %v1002
  %v1099 = vpack.c.b16 %v1005, %v1004
  %v1100 = vpack.c.b16 %v1007, %v1006
  %v1101 = vpack.c.b16 %v1009, %v1008
  %v1102 = vpack.c.b16 %v1011, %v1010
  %v1103 = vpack.c.b16 %v1013, %v1012
  %v1104 = vpack.c.b16 %v1015, %v1014
  %v1105 = vpack.c.b16 %v1017, %v1016
  %v1106 = vpack.c.b16 %v1019, %v1018
  %v1107 = vpack.c.b16 %v1021, %v1020
  %v1108 = vpack.c.b16 %v1023, %v1022
  %v1109 = vpack.c.b16 %v1025, %v1024
  %v1110 = vpack.c.b16 %v1027, %v1026
  %v1111 = vpack.c.b16 %v1029, %v1028
  %v1112 = vpack.c.b16 %v1031, %v1030
  %v1113 = vpack.c.b16 %v1033, %v1032
  %v1114 = vpack.c.b16 %v1035, %v1034
  %v1115 = vpack.c.b16 %v1037, %v1036
  %v1116 = vpack.c.b16 %v1039, %v1038
  %v1117 = vpack.c.b16 %v1041, %v1040
  %v1118 = vpack.c.b16 %v1043, %v1042
  %v1119 = vpack.c.b16 %v1045, %v1044
  %v1120 = vpack.c.b16 %v1047, %v1046
  %v1121 = vpack.c.b16 %v1049, %v1048
  %v1122 = vpack.c.b16 %v1051, %v1050
  %v1123 = vpack.c.b16 %v1053, %v1052
  %v1124 = vpack.c.b16 %v1055, %v1054
  %v1125 = vpack.c.b16 %v1057, %v1056
  %v1126 = vpack.c.b16 %v1059, %v1058
  %v1127 = vpack.c.b16 %v1061, %v1060
  %v1128 = vpack.c.b16 %v1063, %v1062
  %v1129 = vpack.c.b16 %v1065, %v1064
  %v1130 = vpack.c.b16 %v1067, %v1066
  %v1131 = vpack.c.b16 %v1069, %v1068
  %v1132 = vpack.c.b16 %v1071, %v1070
  %v1133 = vpack.c.b16 %v1073, %v1072
  %v1134 = vpack.c.b16 %v1075, %v1074
  %v1135 = vpack.c.b16 %v1077, %v1076
  %v1136 = vpack.c.b16 %v1079, %v1078
  %v1137 = vpack.c.b16 %v1081, %v1080
  %v1138 = vpack.c.b16 %v1083, %v1082
  %v1139 = vpack.c.b16 %v1085, %v1084
  %v1140 = vpack.c.b16 %v1087, %v1086
  %v1141 = vpack.c.b16 %v1089, %v1088
  %v1142 = vpack.c.b16 %v1091, %v1090
  %v1143 = vpack.c.b16 %v1093, %v1092
  %v1144 = vpack.c.b16 %v1095, %v1094
  %v1145 = vpack.c.b16 %v1097, %v1096
  %1194 = vmatprep.subr.bf16.mxu0 0
  %1195 = vmatpush1.bf16.msra.mxu0 %v1098
  %1196 = vmatprep.subr.bf16.mxu0 0
  %1197 = vmatpush1.bf16.msra.mxu0 %v1099
  %1198 = vmatprep.subr.bf16.mxu0 0
  %1199 = vmatpush1.bf16.msra.mxu0 %v1100
  %1200 = vmatprep.subr.bf16.mxu0 0
  %1201 = vmatpush1.bf16.msra.mxu0 %v1101
  %1202 = vmatprep.subr.bf16.mxu0 0
  %1203 = vmatpush1.bf16.msra.mxu0 %v1102
  %1204 = vmatprep.subr.bf16.mxu0 0
  %1205 = vmatpush1.bf16.msra.mxu0 %v1103
  %1206 = vmatprep.subr.bf16.mxu0 0
  %1207 = vmatpush1.bf16.msra.mxu0 %v1104
  %1208 = vmatprep.subr.bf16.mxu0 0
  %1209 = vmatpush1.bf16.msra.mxu0 %v1105
  %1210 = vmatprep.subr.bf16.mxu0 0
  %1211 = vmatpush1.bf16.msra.mxu0 %v1106
  %1212 = vmatprep.subr.bf16.mxu0 0
  %1213 = vmatpush1.bf16.msra.mxu0 %v1107
  %1214 = vmatprep.subr.bf16.mxu0 0
  %1215 = vmatpush1.bf16.msra.mxu0 %v1108
  %1216 = vmatprep.subr.bf16.mxu0 0
  %1217 = vmatpush1.bf16.msra.mxu0 %v1109
  %1218 = vmatprep.subr.bf16.mxu0 0
  %1219 = vmatpush1.bf16.msra.mxu0 %v1110
  %1220 = vmatprep.subr.bf16.mxu0 0
  %1221 = vmatpush1.bf16.msra.mxu0 %v1111
  %1222 = vmatprep.subr.bf16.mxu0 0
  %1223 = vmatpush1.bf16.msra.mxu0 %v1112
  %1224 = vmatprep.subr.bf16.mxu0 0
  %1225 = vmatpush1.bf16.msra.mxu0 %v1113
  %1226 = vmatprep.mubr.bf16.mxu0 %v787
  %1227 = vmatmul.mubr.bf16.gmra.mrb[0].mxu0 %v786
  %v1228 = vpop.f32.mrb[0].mxu0
  %v1229 = vadd.f32 0.0, %v1228
  %v1230 = vpop.f32.mrb[0].mxu0
  %v1231 = vpop.f32.mrb[0].mxu0
  %v1232 = vadd.f32 0.0, %v1231
  %v1233 = vpop.f32.mrb[0].mxu0
  %1234 = vmatprep.mubr.bf16.mxu0 %v790
  %1235 = vmatmul.mubr.bf16.gmra.mrb[0].mxu0 %v789
  %v1236 = vpop.f32.mrb[0].mxu0
  %v1237 = vadd.f32 0.0, %v1236
  %v1238 = vpop.f32.mrb[0].mxu0
  %v1239 = vpop.f32.mrb[0].mxu0
  %v1240 = vadd.f32 0.0, %v1239
  %v1241 = vpop.f32.mrb[0].mxu0
  %1242 = vmatprep.mubr.bf16.mxu0 %v793
  %1243 = vmatmul.mubr.bf16.gmra.mrb[0].mxu0 %v792
  %v1244 = vpop.f32.mrb[0].mxu0
  %v1245 = vadd.f32 0.0, %v1244
  %v1246 = vpop.f32.mrb[0].mxu0
  %v1247 = vpop.f32.mrb[0].mxu0
  %v1248 = vadd.f32 0.0, %v1247
  %v1249 = vpop.f32.mrb[0].mxu0
  %1250 = vmatprep.mubr.bf16.mxu0 %v796
  %1251 = vmatmul.mubr.bf16.gmra.mrb[0].mxu0 %v795
  %v1252 = vpop.f32.mrb[0].mxu0
  %v1253 = vadd.f32 0.0, %v1252
  %v1254 = vpop.f32.mrb[0].mxu0
  %v1255 = vpop.f32.mrb[0].mxu0
  %v1256 = vadd.f32 0.0, %v1255
  %v1257 = vpop.f32.mrb[0].mxu0
  %1258 = vdwg.mxu0
  %1259 = vmatprep.subr.bf16.mxu0 0
  %1260 = vmatpush1.bf16.msra.mxu0 %v1114
  %1261 = vmatprep.subr.bf16.mxu0 0
  %1262 = vmatpush1.bf16.msra.mxu0 %v1115
  %1263 = vmatprep.subr.bf16.mxu0 0
  %1264 = vmatpush1.bf16.msra.mxu0 %v1116
  %1265 = vmatprep.subr.bf16.mxu0 0
  %1266 = vmatpush1.bf16.msra.mxu0 %v1117
  %1267 = vmatprep.subr.bf16.mxu0 0
  %1268 = vmatpush1.bf16.msra.mxu0 %v1118
  %1269 = vmatprep.subr.bf16.mxu0 0
  %1270 = vmatpush1.bf16.msra.mxu0 %v1119
  %1271 = vmatprep.subr.bf16.mxu0 0
  %1272 = vmatpush1.bf16.msra.mxu0 %v1120
  %1273 = vmatprep.subr.bf16.mxu0 0
  %1274 = vmatpush1.bf16.msra.mxu0 %v1121
  %1275 = vmatprep.subr.bf16.mxu0 0
  %1276 = vmatpush1.bf16.msra.mxu0 %v1122
  %1277 = vmatprep.subr.bf16.mxu0 0
  %1278 = vmatpush1.bf16.msra.mxu0 %v1123
  %1279 = vmatprep.subr.bf16.mxu0 0
  %1280 = vmatpush1.bf16.msra.mxu0 %v1124
  %1281 = vmatprep.subr.bf16.mxu0 0
  %1282 = vmatpush1.bf16.msra.mxu0 %v1125
  %1283 = vmatprep.subr.bf16.mxu0 0
  %1284 = vmatpush1.bf16.msra.mxu0 %v1126
  %1285 = vmatprep.subr.bf16.mxu0 0
  %1286 = vmatpush1.bf16.msra.mxu0 %v1127
  %1287 = vmatprep.subr.bf16.mxu0 0
  %1288 = vmatpush1.bf16.msra.mxu0 %v1128
  %1289 = vmatprep.subr.bf16.mxu0 0
  %1290 = vmatpush1.bf16.msra.mxu0 %v1129
  %1291 = vmatprep.mubr.bf16.mxu0 %v693
  %1292 = vmatmul.mubr.bf16.gmra.mrb[0].mxu0 %v788
  %v1293 = vpop.f32.mrb[0].mxu0
  %v1294 = vadd.f32 %v1229, %v1293
  %v1295 = vpop.f32.mrb[0].mxu0
  %v1296 = vpop.f32.mrb[0].mxu0
  %v1297 = vadd.f32 %v1232, %v1296
  %v1298 = vpop.f32.mrb[0].mxu0
  %1299 = vmatprep.mubr.bf16.mxu0 %v694
  %1300 = vmatmul.mubr.bf16.gmra.mrb[0].mxu0 %v791
  %v1301 = vpop.f32.mrb[0].mxu0
  %v1302 = vadd.f32 %v1237, %v1301
  %v1303 = vpop.f32.mrb[0].mxu0
  %v1304 = vpop.f32.mrb[0].mxu0
  %v1305 = vadd.f32 %v1240, %v1304
  %v1306 = vpop.f32.mrb[0].mxu0
  %1307 = vmatprep.mubr.bf16.mxu0 %v695
  %1308 = vmatmul.mubr.bf16.gmra.mrb[0].mxu0 %v794
  %v1309 = vpop.f32.mrb[0].mxu0
  %v1310 = vadd.f32 %v1245, %v1309
  %v1311 = vpop.f32.mrb[0].mxu0
  %v1312 = vpop.f32.mrb[0].mxu0
  %v1313 = vadd.f32 %v1248, %v1312
  %v1314 = vpop.f32.mrb[0].mxu0
  %1315 = vmatprep.mubr.bf16.mxu0 %v696
  %1316 = vmatmul.mubr.bf16.gmra.mrb[0].mxu0 %v797
  %v1317 = vpop.f32.mrb[0].mxu0
  %v1318 = vadd.f32 %v1253, %v1317
  %v1319 = vpop.f32.mrb[0].mxu0
  %v1320 = vpop.f32.mrb[0].mxu0
  %v1321 = vadd.f32 %v1256, %v1320
  %v1322 = vpop.f32.mrb[0].mxu0
  %1323 = vdwg.mxu0
  %1324 = vmatprep.subr.bf16.mxu0 0
  %1325 = vmatpush1.bf16.msra.mxu0 %v1130
  %1326 = vmatprep.subr.bf16.mxu0 0
  %1327 = vmatpush1.bf16.msra.mxu0 %v1131
  %1328 = vmatprep.subr.bf16.mxu0 0
  %1329 = vmatpush1.bf16.msra.mxu0 %v1132
  %1330 = vmatprep.subr.bf16.mxu0 0
  %1331 = vmatpush1.bf16.msra.mxu0 %v1133
  %1332 = vmatprep.subr.bf16.mxu0 0
  %1333 = vmatpush1.bf16.msra.mxu0 %v1134
  %1334 = vmatprep.subr.bf16.mxu0 0
  %1335 = vmatpush1.bf16.msra.mxu0 %v1135
  %1336 = vmatprep.subr.bf16.mxu0 0
  %1337 = vmatpush1.bf16.msra.mxu0 %v1136
  %1338 = vmatprep.subr.bf16.mxu0 0
  %1339 = vmatpush1.bf16.msra.mxu0 %v1137
  %1340 = vmatprep.subr.bf16.mxu0 0
  %1341 = vmatpush1.bf16.msra.mxu0 %v1138
  %1342 = vmatprep.subr.bf16.mxu0 0
  %1343 = vmatpush1.bf16.msra.mxu0 %v1139
  %1344 = vmatprep.subr.bf16.mxu0 0
  %1345 = vmatpush1.bf16.msra.mxu0 %v1140
  %1346 = vmatprep.subr.bf16.mxu0 0
  %1347 = vmatpush1.bf16.msra.mxu0 %v1141
  %1348 = vmatprep.subr.bf16.mxu0 0
  %1349 = vmatpush1.bf16.msra.mxu0 %v1142
  %1350 = vmatprep.subr.bf16.mxu0 0
  %1351 = vmatpush1.bf16.msra.mxu0 %v1143
  %1352 = vmatprep.subr.bf16.mxu0 0
  %1353 = vmatpush1.bf16.msra.mxu0 %v1144
  %1354 = vmatprep.subr.bf16.mxu0 0
  %1355 = vmatpush1.bf16.msra.mxu0 %v1145
  %1356 = vmatprep.mubr.bf16.mxu0 %v726
  %1357 = vmatmul.mubr.bf16.gmra.mrb[0].mxu0 %v697
  %v1358 = vpop.f32.mrb[0].mxu0
  %v1359 = vadd.f32 %v1294, %v1358
  %v1360 = vpop.f32.mrb[0].mxu0
  %v1361 = vpop.f32.mrb[0].mxu0
  %v1362 = vadd.f32 %v1297, %v1361
  %v1363 = vpop.f32.mrb[0].mxu0
  %1364 = vmatprep.mubr.bf16.mxu0 %v727
  %1365 = vmatmul.mubr.bf16.gmra.mrb[0].mxu0 %v698
  %v1366 = vpop.f32.mrb[0].mxu0
  %v1367 = vadd.f32 %v1302, %v1366
  %v1368 = vpop.f32.mrb[0].mxu0
  %v1369 = vpop.f32.mrb[0].mxu0
  %v1370 = vadd.f32 %v1305, %v1369
  %v1371 = vpop.f32.mrb[0].mxu0
  %1372 = vmatprep.mubr.bf16.mxu0 %v728
  %1373 = vmatmul.mubr.bf16.gmra.mrb[0].mxu0 %v699
  %v1374 = vpop.f32.mrb[0].mxu0
  %v1375 = vadd.f32 %v1310, %v1374
  %v1376 = vpop.f32.mrb[0].mxu0
  %v1377 = vpop.f32.mrb[0].mxu0
  %v1378 = vadd.f32 %v1313, %v1377
  %v1379 = vpop.f32.mrb[0].mxu0
  %1380 = vmatprep.mubr.bf16.mxu0 %v729
  %1381 = vmatmul.mubr.bf16.gmra.mrb[0].mxu0 %v700
  %v1382 = vpop.f32.mrb[0].mxu0
  %v1383 = vadd.f32 %v1318, %v1382
  %v1384 = vpop.f32.mrb[0].mxu0
  %v1385 = vpop.f32.mrb[0].mxu0
  %v1386 = vadd.f32 %v1321, %v1385
  %v1387 = vpop.f32.mrb[0].mxu0
  %1388 = vdwg.mxu0
  %v1389 = vld [vmem:[%s7] sm:$0x1]
  %v1390 = vld [vmem:[%s8] sm:$0x1]
  %v1391 = vadd.f32 %v1359, %v1362
  %v1392 = vadd.f32 %v1391, %v1367
  %v1393 = vadd.f32 %v1392, %v1370
  %v1394 = vadd.f32 %v1393, %v1375
  %v1395 = vadd.f32 %v1394, %v1378
  %v1396 = vadd.f32 %v1395, %v1383
  %v1397 = vadd.f32 %v1396, %v1386
  %v1398 = vrot.slane %v1397, 4
  %v1399 = vadd.f32 %v1397, %v1398
  %v1400 = vrot.slane %v1399, 2
  %v1401 = vadd.f32 %v1399, %v1400
  %v1402 = vrot.slane %v1401, 1
  %v1403 = vadd.f32 %v1401, %v1402
  %v1404 = vmul.f32 %v1359, %v1359
  %v1405 = vmul.f32 %v1362, %v1362
  %v1406 = vmul.f32 %v1367, %v1367
  %v1407 = vmul.f32 %v1370, %v1370
  %v1408 = vmul.f32 %v1375, %v1375
  %v1409 = vmul.f32 %v1378, %v1378
  %v1410 = vmul.f32 %v1383, %v1383
  %v1411 = vmul.f32 %v1386, %v1386
  %v1412 = vadd.f32 %v1404, %v1405
  %v1413 = vadd.f32 %v1412, %v1406
  %v1414 = vadd.f32 %v1413, %v1407
  %v1415 = vadd.f32 %v1414, %v1408
  %v1416 = vadd.f32 %v1415, %v1409
  %v1417 = vadd.f32 %v1416, %v1410
  %v1418 = vadd.f32 %v1417, %v1411
  %v1419 = vrot.slane %v1418, 4
  %v1420 = vadd.f32 %v1418, %v1419
  %v1421 = vrot.slane %v1420, 2
  %v1422 = vadd.f32 %v1420, %v1421
  %v1423 = vrot.slane %v1422, 1
  %v1424 = vadd.f32 %v1422, %v1423
  %vm1425 = vcmask 1040384
  %v1426 = vsel %vm1425, %v1403, %v1424
  %1427 = vrot.lane.b32.xlu0 %v1426, 4
  %v1428 = vpop.permute.xlu0 %1427
  %v1429 = vadd.f32 %v1426, %v1428
  %1430 = vrot.lane.b32.xlu0 %v1429, 8
  %v1431 = vpop.permute.xlu0 %1430
  %v1432 = vadd.f32 %v1429, %v1431
  %1433 = vrot.lane.b32.xlu0 %v1432, 16
  %v1434 = vpop.permute.xlu0 %1433
  %v1435 = vadd.f32 %v1432, %v1434
  %1436 = vrot.lane.b32.xlu0 %v1435, 32
  %v1437 = vpop.permute.xlu0 %1436
  %v1438 = vadd.f32 %v1435, %v1437
  %1439 = vrot.lane.b32.xlu0 %v1438, 64
  %v1440 = vpop.permute.xlu0 %1439
  %v1441 = vadd.f32 %v1438, %v1440
  %v1442 = vmul.f32 %v1441, 0.00048828125
  %v1443 = vmul.f32 %v1442, %v1442
  %v1445 = vrot.slane %v1443, 7
  %v1447 = vsub.f32 %v1442, %v1445
  %v1448 = vmax.f32 %v1447, 0.0
  %v1449 = vadd.f32 %v1448, 1e-05
  %v1450 = vrsqrt.pop %v1449
  %v1453 = vunpack.c.l.s4 1966171168
  %v1454 = vunpack.c.0.s8 %v1453
  %v1455 = vlaneseq
  %v1456 = vshrl.u32 %v1455, 7
  %v1457 = vsub.s32 %v1454, %v1456
  %v1458 = vrot.slane %v1450, %v1457
  %v1459 = vcombine.high %v1458, %v1458
  %v1461 = vunpack.c.l.s4 1966171168
  %v1462 = vunpack.c.0.s8 %v1461
  %v1463 = vlaneseq
  %v1464 = vshrl.u32 %v1463, 7
  %v1465 = vsub.s32 %v1462, %v1464
  %v1466 = vrot.slane %v1459, %v1465
  %v1468 = vmul.f32 %v1389, %v1466
  %v1469 = vmul.f32 %v1442, %v1468
  %v1470 = vsub.f32 %v1390, %v1469
  %v1472 = vlaneseq
  %v1473 = vshrl.u32 %v1472, 7
  %v1474 = vsub.s32 0, %v1473
  %v1475 = vrot.slane %v1468, %v1474
  %v1477 = vmul.f32 %v1359, %v1475
  %v1478 = vmul.f32 %v1362, %v1475
  %v1479 = vmul.f32 %v1367, %v1475
  %v1480 = vmul.f32 %v1370, %v1475
  %v1481 = vmul.f32 %v1375, %v1475
  %v1482 = vmul.f32 %v1378, %v1475
  %v1483 = vmul.f32 %v1383, %v1475
  %v1484 = vmul.f32 %v1386, %v1475
  %v1486 = vlaneseq
  %v1487 = vshrl.u32 %v1486, 7
  %v1488 = vsub.s32 0, %v1487
  %v1489 = vrot.slane %v1470, %v1488
  %v1491 = vadd.f32 %v1477, %v1489
  %v1492 = vadd.f32 %v1478, %v1489
  %v1493 = vadd.f32 %v1479, %v1489
  %v1494 = vadd.f32 %v1480, %v1489
  %v1495 = vadd.f32 %v1481, %v1489
  %v1496 = vadd.f32 %v1482, %v1489
  %v1497 = vadd.f32 %v1483, %v1489
  %v1498 = vadd.f32 %v1484, %v1489
  %v1499 = vmax.f32 %v1491, 0.0
  %v1500 = vmax.f32 %v1492, 0.0
  %v1501 = vmax.f32 %v1493, 0.0
  %v1502 = vmax.f32 %v1494, 0.0
  %v1503 = vmax.f32 %v1495, 0.0
  %v1504 = vmax.f32 %v1496, 0.0
  %v1505 = vmax.f32 %v1497, 0.0
  %v1506 = vmax.f32 %v1498, 0.0
  %v1507 = vrot.slane %v1499, 7
  %v1508 = vrot.slane %v1500, 7
  %v1509 = vrot.slane %v1501, 7
  %v1510 = vrot.slane %v1502, 7
  %v1511 = vrot.slane %v1503, 7
  %v1512 = vrot.slane %v1504, 7
  %v1513 = vrot.slane %v1505, 7
  %v1514 = vrot.slane %v1506, 7
  %v1515 = vsel %vm676, %v1513, %v1514
  %v1516 = vsel %vm676, %v1512, %v1513
  %v1517 = vsel %vm676, %v1511, %v1512
  %v1518 = vsel %vm676, %v1510, %v1511
  %v1519 = vsel %vm676, %v1509, %v1510
  %v1520 = vsel %vm676, %v1508, %v1509
  %v1521 = vsel %vm676, %v1507, %v1508
  %v1522 = vsel %vm676, %v1514, %v1507
  %v1523 = vmul.f32 %v1522, %v160
  %v1524 = vmul.f32 %v1521, %v161
  %v1525 = vmul.f32 %v1520, %v162
  %v1526 = vmul.f32 %v1519, %v163
  %v1527 = vmul.f32 %v1518, %v164
  %v1528 = vmul.f32 %v1517, %v165
  %v1529 = vmul.f32 %v1516, %v166
  %v1530 = vmul.f32 %v1515, %v167
  %v1531 = vpack.c.bf16 %v1524, %v1523
  %v1532 = vpack.c.bf16 %v1526, %v1525
  %v1533 = vpack.c.bf16 %v1528, %v1527
  %v1534 = vpack.c.bf16 %v1530, %v1529
  %v1535 = vpack.c.bf16 %v1500, %v1499
  %v1536 = vpack.c.bf16 %v1502, %v1501
  %v1537 = vpack.c.bf16 %v1504, %v1503
  %v1538 = vpack.c.bf16 %v1506, %v1505
  %v1539 = vrot.slane %v1499, 1
  %v1540 = vrot.slane %v1500, 1
  %v1541 = vrot.slane %v1501, 1
  %v1542 = vrot.slane %v1502, 1
  %v1543 = vrot.slane %v1503, 1
  %v1544 = vrot.slane %v1504, 1
  %v1545 = vrot.slane %v1505, 1
  %v1546 = vrot.slane %v1506, 1
  %v1547 = vsel %vm709, %v1545, %v1546
  %v1548 = vsel %vm709, %v1544, %v1545
  %v1549 = vsel %vm709, %v1543, %v1544
  %v1550 = vsel %vm709, %v1542, %v1543
  %v1551 = vsel %vm709, %v1541, %v1542
  %v1552 = vsel %vm709, %v1540, %v1541
  %v1553 = vsel %vm709, %v1539, %v1540
  %v1554 = vsel %vm709, %v1546, %v1539
  %v1555 = vmul.f32 %v1553, %v184
  %v1556 = vmul.f32 %v1552, %v185
  %v1557 = vmul.f32 %v1551, %v186
  %v1558 = vmul.f32 %v1550, %v187
  %v1559 = vmul.f32 %v1549, %v188
  %v1560 = vmul.f32 %v1548, %v189
  %v1561 = vmul.f32 %v1547, %v190
  %v1562 = vmul.f32 %v1554, %v191
  %v1563 = vpack.c.bf16 %v1556, %v1555
  %v1564 = vpack.c.bf16 %v1558, %v1557
  %v1565 = vpack.c.bf16 %v1560, %v1559
  %v1566 = vpack.c.bf16 %v1562, %v1561
  %v1567 = vld [vmem:[%s6] sm:$0xf]
  %v1568 = vld [vmem:[%s6 + $0x4] sm:$0xf]
  %v1569 = vld [vmem:[%s6 + $0x8] sm:$0xf]
  %v1570 = vld [vmem:[%s6 + $0xc] sm:$0xf]
  %v1571 = vld [vmem:[%s6 + $0x10] sm:$0xf]
  %v1572 = vld [vmem:[%s6 + $0x14] sm:$0xf]
  %v1573 = vld [vmem:[%s6 + $0x18] sm:$0xf]
  %v1574 = vld [vmem:[%s6 + $0x1c] sm:$0xf]
  %v1575 = vld [vmem:[%s6 + $0x20] sm:$0xf]
  %v1576 = vld [vmem:[%s6 + $0x24] sm:$0xf]
  %v1577 = vld [vmem:[%s6 + $0x28] sm:$0xf]
  %v1578 = vld [vmem:[%s6 + $0x2c] sm:$0xf]
  %v1579 = vld [vmem:[%s6 + $0x30] sm:$0xf]
  %v1580 = vld [vmem:[%s6 + $0x34] sm:$0xf]
  %v1581 = vld [vmem:[%s6 + $0x38] sm:$0xf]
  %v1582 = vld [vmem:[%s6 + $0x3c] sm:$0xf]
  %v1583 = vld [vmem:[%s6 + $0x40] sm:$0xf]
  %v1584 = vld [vmem:[%s6 + $0x44] sm:$0xf]
  %v1585 = vld [vmem:[%s6 + $0x48] sm:$0xf]
  %v1586 = vld [vmem:[%s6 + $0x4c] sm:$0xf]
  %v1587 = vld [vmem:[%s6 + $0x50] sm:$0xf]
  %v1588 = vld [vmem:[%s6 + $0x54] sm:$0xf]
  %v1589 = vld [vmem:[%s6 + $0x58] sm:$0xf]
  %v1590 = vld [vmem:[%s6 + $0x5c] sm:$0xf]
  %v1591 = vld [vmem:[%s6 + $0x60] sm:$0xf]
  %v1592 = vld [vmem:[%s6 + $0x64] sm:$0xf]
  %v1593 = vld [vmem:[%s6 + $0x68] sm:$0xf]
  %v1594 = vld [vmem:[%s6 + $0x6c] sm:$0xf]
  %v1595 = vld [vmem:[%s6 + $0x70] sm:$0xf]
  %v1596 = vld [vmem:[%s6 + $0x74] sm:$0xf]
  %v1597 = vld [vmem:[%s6 + $0x78] sm:$0xf]
  %v1598 = vld [vmem:[%s6 + $0x7c] sm:$0xf]
  %v1599 = vld [vmem:[%s6 + $0x80] sm:$0xf]
  %v1600 = vld [vmem:[%s6 + $0x84] sm:$0xf]
  %v1601 = vld [vmem:[%s6 + $0x88] sm:$0xf]
  %v1602 = vld [vmem:[%s6 + $0x8c] sm:$0xf]
  %v1603 = vld [vmem:[%s6 + $0x90] sm:$0xf]
  %v1604 = vld [vmem:[%s6 + $0x94] sm:$0xf]
  %v1605 = vld [vmem:[%s6 + $0x98] sm:$0xf]
  %v1606 = vld [vmem:[%s6 + $0x9c] sm:$0xf]
  %v1607 = vld [vmem:[%s6 + $0xa0] sm:$0xf]
  %v1608 = vld [vmem:[%s6 + $0xa4] sm:$0xf]
  %v1609 = vld [vmem:[%s6 + $0xa8] sm:$0xf]
  %v1610 = vld [vmem:[%s6 + $0xac] sm:$0xf]
  %v1611 = vld [vmem:[%s6 + $0xb0] sm:$0xf]
  %v1612 = vld [vmem:[%s6 + $0xb4] sm:$0xf]
  %v1613 = vld [vmem:[%s6 + $0xb8] sm:$0xf]
  %v1614 = vld [vmem:[%s6 + $0xbc] sm:$0xf]
  %v1663 = vunpack.c.l.b16 %v1567
  %v1664 = vunpack.c.l.b16 %v1568
  %v1665 = vunpack.c.l.b16 %v1569
  %v1666 = vunpack.c.l.b16 %v1570
  %v1667 = vunpack.c.l.b16 %v1571
  %v1668 = vunpack.c.l.b16 %v1572
  %v1669 = vunpack.c.l.b16 %v1573
  %v1670 = vunpack.c.l.b16 %v1574
  %v1671 = vunpack.c.l.b16 %v1575
  %v1672 = vunpack.c.l.b16 %v1576
  %v1673 = vunpack.c.l.b16 %v1577
  %v1674 = vunpack.c.l.b16 %v1578
  %v1675 = vunpack.c.l.b16 %v1579
  %v1676 = vunpack.c.l.b16 %v1580
  %v1677 = vunpack.c.l.b16 %v1581
  %v1678 = vunpack.c.l.b16 %v1582
  %v1679 = vunpack.c.l.b16 %v1583
  %v1680 = vunpack.c.l.b16 %v1584
  %v1681 = vunpack.c.l.b16 %v1585
  %v1682 = vunpack.c.l.b16 %v1586
  %v1683 = vunpack.c.l.b16 %v1587
  %v1684 = vunpack.c.l.b16 %v1588
  %v1685 = vunpack.c.l.b16 %v1589
  %v1686 = vunpack.c.l.b16 %v1590
  %v1687 = vunpack.c.l.b16 %v1591
  %v1688 = vunpack.c.l.b16 %v1592
  %v1689 = vunpack.c.l.b16 %v1593
  %v1690 = vunpack.c.l.b16 %v1594
  %v1691 = vunpack.c.l.b16 %v1595
  %v1692 = vunpack.c.l.b16 %v1596
  %v1693 = vunpack.c.l.b16 %v1597
  %v1694 = vunpack.c.l.b16 %v1598
  %v1695 = vunpack.c.l.b16 %v1599
  %v1696 = vunpack.c.l.b16 %v1600
  %v1697 = vunpack.c.l.b16 %v1601
  %v1698 = vunpack.c.l.b16 %v1602
  %v1699 = vunpack.c.l.b16 %v1603
  %v1700 = vunpack.c.l.b16 %v1604
  %v1701 = vunpack.c.l.b16 %v1605
  %v1702 = vunpack.c.l.b16 %v1606
  %v1703 = vunpack.c.l.b16 %v1607
  %v1704 = vunpack.c.l.b16 %v1608
  %v1705 = vunpack.c.l.b16 %v1609
  %v1706 = vunpack.c.l.b16 %v1610
  %v1707 = vunpack.c.l.b16 %v1611
  %v1708 = vunpack.c.l.b16 %v1612
  %v1709 = vunpack.c.l.b16 %v1613
  %v1710 = vunpack.c.l.b16 %v1614
  %v1711 = vpack.c.b16 %v1664, %v1663
  %v1712 = vpack.c.b16 %v1666, %v1665
  %v1713 = vpack.c.b16 %v1668, %v1667
  %v1714 = vpack.c.b16 %v1670, %v1669
  %v1715 = vpack.c.b16 %v1672, %v1671
  %v1716 = vpack.c.b16 %v1674, %v1673
  %v1717 = vpack.c.b16 %v1676, %v1675
  %v1718 = vpack.c.b16 %v1678, %v1677
  %v1719 = vpack.c.b16 %v1680, %v1679
  %v1720 = vpack.c.b16 %v1682, %v1681
  %v1721 = vpack.c.b16 %v1684, %v1683
  %v1722 = vpack.c.b16 %v1686, %v1685
  %v1723 = vpack.c.b16 %v1688, %v1687
  %v1724 = vpack.c.b16 %v1690, %v1689
  %v1725 = vpack.c.b16 %v1692, %v1691
  %v1726 = vpack.c.b16 %v1694, %v1693
  %v1727 = vpack.c.b16 %v1696, %v1695
  %v1728 = vpack.c.b16 %v1698, %v1697
  %v1729 = vpack.c.b16 %v1700, %v1699
  %v1730 = vpack.c.b16 %v1702, %v1701
  %v1731 = vpack.c.b16 %v1704, %v1703
  %v1732 = vpack.c.b16 %v1706, %v1705
  %v1733 = vpack.c.b16 %v1708, %v1707
  %v1734 = vpack.c.b16 %v1710, %v1709
  %1759 = vmatprep.subr.bf16.mxu0 0
  %1760 = vmatpush1.bf16.msra.mxu0 %v1711
  %1761 = vmatprep.subr.bf16.mxu0 0
  %1762 = vmatpush1.bf16.msra.mxu0 %v1712
  %1763 = vmatprep.subr.bf16.mxu0 0
  %1764 = vmatpush1.bf16.msra.mxu0 %v1713
  %1765 = vmatprep.subr.bf16.mxu0 0
  %1766 = vmatpush1.bf16.msra.mxu0 %v1714
  %1767 = vmatprep.subr.bf16.mxu0 0
  %1768 = vmatpush1.bf16.msra.mxu0 %v1715
  %1769 = vmatprep.subr.bf16.mxu0 0
  %1770 = vmatpush1.bf16.msra.mxu0 %v1716
  %1771 = vmatprep.subr.bf16.mxu0 0
  %1772 = vmatpush1.bf16.msra.mxu0 %v1717
  %1773 = vmatprep.subr.bf16.mxu0 0
  %1774 = vmatpush1.bf16.msra.mxu0 %v1718
  %1775 = vmatprep.subr.bf16.mxu0 0
  %1776 = vmatpush1.bf16.msra.mxu0 %v1719
  %1777 = vmatprep.subr.bf16.mxu0 0
  %1778 = vmatpush1.bf16.msra.mxu0 %v1720
  %1779 = vmatprep.subr.bf16.mxu0 0
  %1780 = vmatpush1.bf16.msra.mxu0 %v1721
  %1781 = vmatprep.subr.bf16.mxu0 0
  %1782 = vmatpush1.bf16.msra.mxu0 %v1722
  %1783 = vmatprep.subr.bf16.mxu0 0
  %1784 = vmatpush1.bf16.msra.mxu0 %v1723
  %1785 = vmatprep.subr.bf16.mxu0 0
  %1786 = vmatpush1.bf16.msra.mxu0 %v1724
  %1787 = vmatprep.subr.bf16.mxu0 0
  %1788 = vmatpush1.bf16.msra.mxu0 %v1725
  %1789 = vmatprep.subr.bf16.mxu0 0
  %1790 = vmatpush1.bf16.msra.mxu0 %v1726
  %1791 = vmatprep.mubr.bf16.mxu0 %v1535
  %1792 = vmatmul.mubr.bf16.gmra.mrb[0].mxu0 %v1531
  %v1793 = vpop.f32.mrb[0].mxu0
  %v1794 = vadd.f32 0.0, %v1793
  %v1795 = vpop.f32.mrb[0].mxu0
  %v1796 = vpop.f32.mrb[0].mxu0
  %v1797 = vadd.f32 0.0, %v1796
  %v1798 = vpop.f32.mrb[0].mxu0
  %1799 = vmatprep.mubr.bf16.mxu0 %v1536
  %1800 = vmatmul.mubr.bf16.gmra.mrb[0].mxu0 %v1532
  %v1801 = vpop.f32.mrb[0].mxu0
  %v1802 = vadd.f32 0.0, %v1801
  %v1803 = vpop.f32.mrb[0].mxu0
  %v1804 = vpop.f32.mrb[0].mxu0
  %v1805 = vadd.f32 0.0, %v1804
  %v1806 = vpop.f32.mrb[0].mxu0
  %1807 = vmatprep.mubr.bf16.mxu0 %v1537
  %1808 = vmatmul.mubr.bf16.gmra.mrb[0].mxu0 %v1533
  %v1809 = vpop.f32.mrb[0].mxu0
  %v1810 = vadd.f32 0.0, %v1809
  %v1811 = vpop.f32.mrb[0].mxu0
  %v1812 = vpop.f32.mrb[0].mxu0
  %v1813 = vadd.f32 0.0, %v1812
  %v1814 = vpop.f32.mrb[0].mxu0
  %1815 = vmatprep.mubr.bf16.mxu0 %v1538
  %1816 = vmatmul.mubr.bf16.gmra.mrb[0].mxu0 %v1534
  %v1817 = vpop.f32.mrb[0].mxu0
  %v1818 = vadd.f32 0.0, %v1817
  %v1819 = vpop.f32.mrb[0].mxu0
  %v1820 = vpop.f32.mrb[0].mxu0
  %v1821 = vadd.f32 0.0, %v1820
  %v1822 = vpop.f32.mrb[0].mxu0
  %1823 = vdwg.mxu0
  %1824 = vmatprep.subr.bf16.mxu0 0
  %1825 = vmatpush1.bf16.msra.mxu0 %v1727
  %1826 = vmatprep.subr.bf16.mxu0 0
  %1827 = vmatpush1.bf16.msra.mxu0 %v1728
  %1828 = vmatprep.subr.bf16.mxu0 0
  %1829 = vmatpush1.bf16.msra.mxu0 %v1729
  %1830 = vmatprep.subr.bf16.mxu0 0
  %1831 = vmatpush1.bf16.msra.mxu0 %v1730
  %1832 = vmatprep.subr.bf16.mxu0 0
  %1833 = vmatpush1.bf16.msra.mxu0 %v1731
  %1834 = vmatprep.subr.bf16.mxu0 0
  %1835 = vmatpush1.bf16.msra.mxu0 %v1732
  %1836 = vmatprep.subr.bf16.mxu0 0
  %1837 = vmatpush1.bf16.msra.mxu0 %v1733
  %1838 = vmatprep.subr.bf16.mxu0 0
  %1839 = vmatpush1.bf16.msra.mxu0 %v1734
  %1840 = vmatprep.subr.bf16.mxu0 0
  %1841 = vmatpush1.bf16.msra.mxu0 0
  %1842 = vmatprep.subr.bf16.mxu0 0
  %1843 = vmatpush1.bf16.msra.mxu0 0
  %1844 = vmatprep.subr.bf16.mxu0 0
  %1845 = vmatpush1.bf16.msra.mxu0 0
  %1846 = vmatprep.subr.bf16.mxu0 0
  %1847 = vmatpush1.bf16.msra.mxu0 0
  %1848 = vmatprep.subr.bf16.mxu0 0
  %1849 = vmatpush1.bf16.msra.mxu0 0
  %1850 = vmatprep.subr.bf16.mxu0 0
  %1851 = vmatpush1.bf16.msra.mxu0 0
  %1852 = vmatprep.subr.bf16.mxu0 0
  %1853 = vmatpush1.bf16.msra.mxu0 0
  %1854 = vmatprep.subr.bf16.mxu0 0
  %1855 = vmatpush1.bf16.msra.mxu0 0
  %1856 = vmatprep.mubr.bf16.mxu0 0
  %1857 = vmatmul.mubr.bf16.gmra.mrb[0].mxu0 %v1563
  %v1858 = vpop.f32.mrb[0].mxu0
  %v1859 = vadd.f32 %v1794, %v1858
  %v1860 = vpop.f32.mrb[0].mxu0
  %v1861 = vpop.f32.mrb[0].mxu0
  %v1862 = vadd.f32 %v1797, %v1861
  %v1863 = vpop.f32.mrb[0].mxu0
  %1864 = vmatprep.mubr.bf16.mxu0 0
  %1865 = vmatmul.mubr.bf16.gmra.mrb[0].mxu0 %v1564
  %v1866 = vpop.f32.mrb[0].mxu0
  %v1867 = vadd.f32 %v1802, %v1866
  %v1868 = vpop.f32.mrb[0].mxu0
  %v1869 = vpop.f32.mrb[0].mxu0
  %v1870 = vadd.f32 %v1805, %v1869
  %v1871 = vpop.f32.mrb[0].mxu0
  %1872 = vmatprep.mubr.bf16.mxu0 0
  %1873 = vmatmul.mubr.bf16.gmra.mrb[0].mxu0 %v1565
  %v1874 = vpop.f32.mrb[0].mxu0
  %v1875 = vadd.f32 %v1810, %v1874
  %v1876 = vpop.f32.mrb[0].mxu0
  %v1877 = vpop.f32.mrb[0].mxu0
  %v1878 = vadd.f32 %v1813, %v1877
  %v1879 = vpop.f32.mrb[0].mxu0
  %1880 = vmatprep.mubr.bf16.mxu0 0
  %1881 = vmatmul.mubr.bf16.gmra.mrb[0].mxu0 %v1566
  %v1882 = vpop.f32.mrb[0].mxu0
  %v1883 = vadd.f32 %v1818, %v1882
  %v1884 = vpop.f32.mrb[0].mxu0
  %v1885 = vpop.f32.mrb[0].mxu0
  %v1886 = vadd.f32 %v1821, %v1885
  %v1887 = vpop.f32.mrb[0].mxu0
  %1888 = vdwg.mxu0
  %v1889 = vld [vmem:[%s9] sm:$0x1]
  %v1890 = vld [vmem:[%s10] sm:$0x1]
  %v1891 = vadd.f32 %v1859, %v1862
  %v1892 = vadd.f32 %v1891, %v1867
  %v1893 = vadd.f32 %v1892, %v1870
  %v1894 = vadd.f32 %v1893, %v1875
  %v1895 = vadd.f32 %v1894, %v1878
  %v1896 = vadd.f32 %v1895, %v1883
  %v1897 = vadd.f32 %v1896, %v1886
  %v1898 = vrot.slane %v1897, 4
  %v1899 = vadd.f32 %v1897, %v1898
  %v1900 = vrot.slane %v1899, 2
  %v1901 = vadd.f32 %v1899, %v1900
  %v1902 = vrot.slane %v1901, 1
  %v1903 = vadd.f32 %v1901, %v1902
  %v1904 = vmul.f32 %v1859, %v1859
  %v1905 = vmul.f32 %v1862, %v1862
  %v1906 = vmul.f32 %v1867, %v1867
  %v1907 = vmul.f32 %v1870, %v1870
  %v1908 = vmul.f32 %v1875, %v1875
  %v1909 = vmul.f32 %v1878, %v1878
  %v1910 = vmul.f32 %v1883, %v1883
  %v1911 = vmul.f32 %v1886, %v1886
  %v1912 = vadd.f32 %v1904, %v1905
  %v1913 = vadd.f32 %v1912, %v1906
  %v1914 = vadd.f32 %v1913, %v1907
  %v1915 = vadd.f32 %v1914, %v1908
  %v1916 = vadd.f32 %v1915, %v1909
  %v1917 = vadd.f32 %v1916, %v1910
  %v1918 = vadd.f32 %v1917, %v1911
  %v1919 = vrot.slane %v1918, 4
  %v1920 = vadd.f32 %v1918, %v1919
  %v1921 = vrot.slane %v1920, 2
  %v1922 = vadd.f32 %v1920, %v1921
  %v1923 = vrot.slane %v1922, 1
  %v1924 = vadd.f32 %v1922, %v1923
  %v1925 = vsel %vm1425, %v1903, %v1924
  %1926 = vrot.lane.b32.xlu0 %v1925, 4
  %v1927 = vpop.permute.xlu0 %1926
  %v1928 = vadd.f32 %v1925, %v1927
  %1929 = vrot.lane.b32.xlu0 %v1928, 8
  %v1930 = vpop.permute.xlu0 %1929
  %v1931 = vadd.f32 %v1928, %v1930
  %1932 = vrot.lane.b32.xlu0 %v1931, 16
  %v1933 = vpop.permute.xlu0 %1932
  %v1934 = vadd.f32 %v1931, %v1933
  %1935 = vrot.lane.b32.xlu0 %v1934, 32
  %v1936 = vpop.permute.xlu0 %1935
  %v1937 = vadd.f32 %v1934, %v1936
  %1938 = vrot.lane.b32.xlu0 %v1937, 64
  %v1939 = vpop.permute.xlu0 %1938
  %v1940 = vadd.f32 %v1937, %v1939
  %v1941 = vmul.f32 %v1940, 0.00048828125
  %v1942 = vmul.f32 %v1941, %v1941
  %v1944 = vrot.slane %v1942, 7
  %v1946 = vsub.f32 %v1941, %v1944
  %v1947 = vmax.f32 %v1946, 0.0
  %v1948 = vadd.f32 %v1947, 1e-05
  %v1949 = vrsqrt.pop %v1948
  %v1952 = vunpack.c.l.s4 1966171168
  %v1953 = vunpack.c.0.s8 %v1952
  %v1954 = vlaneseq
  %v1955 = vshrl.u32 %v1954, 7
  %v1956 = vsub.s32 %v1953, %v1955
  %v1957 = vrot.slane %v1949, %v1956
  %v1958 = vcombine.high %v1957, %v1957
  %v1960 = vunpack.c.l.s4 1966171168
  %v1961 = vunpack.c.0.s8 %v1960
  %v1962 = vlaneseq
  %v1963 = vshrl.u32 %v1962, 7
  %v1964 = vsub.s32 %v1961, %v1963
  %v1965 = vrot.slane %v1958, %v1964
  %v1967 = vmul.f32 %v1889, %v1965
  %v1968 = vmul.f32 %v1941, %v1967
  %v1969 = vsub.f32 %v1890, %v1968
  %v1971 = vlaneseq
  %v1972 = vshrl.u32 %v1971, 7
  %v1973 = vsub.s32 0, %v1972
  %v1974 = vrot.slane %v1967, %v1973
  %v1976 = vmul.f32 %v1859, %v1974
  %v1977 = vmul.f32 %v1862, %v1974
  %v1978 = vmul.f32 %v1867, %v1974
  %v1979 = vmul.f32 %v1870, %v1974
  %v1980 = vmul.f32 %v1875, %v1974
  %v1981 = vmul.f32 %v1878, %v1974
  %v1982 = vmul.f32 %v1883, %v1974
  %v1983 = vmul.f32 %v1886, %v1974
  %v1985 = vlaneseq
  %v1986 = vshrl.u32 %v1985, 7
  %v1987 = vsub.s32 0, %v1986
  %v1988 = vrot.slane %v1969, %v1987
  %v1990 = vadd.f32 %v1976, %v1988
  %v1991 = vadd.f32 %v1977, %v1988
  %v1992 = vadd.f32 %v1978, %v1988
  %v1993 = vadd.f32 %v1979, %v1988
  %v1994 = vadd.f32 %v1980, %v1988
  %v1995 = vadd.f32 %v1981, %v1988
  %v1996 = vadd.f32 %v1982, %v1988
  %v1997 = vadd.f32 %v1983, %v1988
  %v1998 = vmax.f32 %v1990, 0.0
  %v1999 = vmax.f32 %v1991, 0.0
  %v2000 = vmax.f32 %v1992, 0.0
  %v2001 = vmax.f32 %v1993, 0.0
  %v2002 = vmax.f32 %v1994, 0.0
  %v2003 = vmax.f32 %v1995, 0.0
  %v2004 = vmax.f32 %v1996, 0.0
  %v2005 = vmax.f32 %v1997, 0.0
  %2006 = vst [vmem:[%s11] sm:$0xff] %v1998
  %2007 = vst [vmem:[%s11 + $0x8] sm:$0xff] %v1999
  %2008 = vst [vmem:[%s11 + $0x10] sm:$0xff] %v2000
  %2009 = vst [vmem:[%s11 + $0x18] sm:$0xff] %v2001
  %2010 = vst [vmem:[%s11 + $0x20] sm:$0xff] %v2002
  %2011 = vst [vmem:[%s11 + $0x28] sm:$0xff] %v2003
  %2012 = vst [vmem:[%s11 + $0x30] sm:$0xff] %v2004
  %2013 = vst [vmem:[%s11 + $0x38] sm:$0xff] %v2005
  // Predicated region
  $region46: #{decoder_forward.1} parent=0 // pred_check
    _
  $region47: #{decoder_forward.1} parent=0 // pred_check_branch
    %2015 = sbr.rel (0) target = $region49
  $region48: #{decoder_forward.1} parent=0 // pred_region
    _
  $region49: #{decoder_forward.1} parent=0 // pred_fallthru
    _
  // Predicated region
  $region50: #{decoder_forward.1} parent=0 // pred_check
    _
  $region51: #{decoder_forward.1} parent=0 // pred_check_branch
    %2017 = sbr.rel (0) target = $region53
  $region52: #{decoder_forward.1} parent=0 // pred_region
    _
  $region53: #{decoder_forward.1} parent=0 // pred_fallthru
    _

</llo_original>
